<compile_context>
chip_gen: v6e
topology: v6e:2x2x1
jax: 0.10.0
libtpu: 0.0.40
codegen_flags: <defaults>
</compile_context>

<pallas_src>
import math
import jax
import jax.numpy as jnp
from jax import lax
from jax.experimental import pallas as pl
from jax.experimental.pallas import tpu as pltpu


def gru_kernel(x_ref, h0_ref, wi_ref, wh_ref, bi_ref, bhn_ref,
               wl_ref, bl_ref, out_ref):
    """Full GRU time loop + linear head on the final hidden state.

    x_ref  : (B, T, I)  batch-first input sequence
    h0_ref : (B, H)     initial hidden state
    wi_ref : (I, 3H)    fused input weights  [W_ir | W_iz | W_in] (transposed)
    wh_ref : (H, 3H)    fused hidden weights [W_hr | W_hz | W_hn] (transposed)
    bi_ref : (1, 3H)    folded biases [b_ir+b_hr | b_iz+b_hz | b_in]
    bhn_ref: (1, H)     b_hn (stays inside the r_t * (...) term)
    wl_ref : (H, O)     linear head weight (transposed)
    bl_ref : (1, 1)     linear head bias, in SMEM (O == 1)
    out_ref: (B, O)
    """
    B, T, _ = x_ref.shape
    H = h0_ref.shape[1]

    # ---- Prologue: input projection for ALL timesteps in one matmul --------
    # (B, T, I) -> (B*T, I) is layout-free (T == sublane tile of 8).
    x_flat = x_ref[...].reshape(B * T, x_ref.shape[2])
    xw = (jnp.dot(x_flat, wi_ref[...], preferred_element_type=jnp.float32)
          + bi_ref[...])                       # (B*T, 3H), biases folded here
    xw = xw.reshape(B, T, 3 * H)

    # Per-timestep, per-gate slices, hoisted off the recurrent chain
    # (all-static slices thanks to the full unroll below).
    xw_r = [xw[:, t, 0 * H:1 * H] for t in range(T)]
    xw_z = [xw[:, t, 1 * H:2 * H] for t in range(T)]
    xw_n = [xw[:, t, 2 * H:3 * H] for t in range(T)]

    b_hn = jnp.broadcast_to(bhn_ref[...], (B, H))  # broadcast once, not per-step
    wh = wh_ref[...]                               # (H, 3H), loaded once

    # ---- Serial recurrence: one (B,H)x(H,3H) matmul per step ---------------
    h = h0_ref[...]
    for t in range(T):  # T is compile-time fixed -> full static unroll
        hw = jnp.dot(h, wh, preferred_element_type=jnp.float32)   # (B, 3H)
        r = jax.nn.sigmoid(xw_r[t] + hw[:, 0 * H:1 * H])
        z = jax.nn.sigmoid(xw_z[t] + hw[:, 1 * H:2 * H])
        n = jnp.tanh(xw_n[t] + r * (hw[:, 2 * H:3 * H] + b_hn))
        h = (1.0 - z) * n + z * h

    # ---- Linear head on the final hidden state ------------------------------
    out_ref[...] = (jnp.dot(h, wl_ref[...], preferred_element_type=jnp.float32)
                    + bl_ref[0, 0])            # scalar bias folded from SMEM


def gru_forward(x, h0, params):
    """x: (B, T, I) batch-first (PyTorch convention). Returns (B, O)."""
    B, T, I = x.shape
    O = params["w_lin"].shape[1]

    vmem = pl.BlockSpec(memory_space=pltpu.MemorySpace.VMEM)
    smem = pl.BlockSpec(memory_space=pltpu.MemorySpace.SMEM)

    kernel = pl.pallas_call(
        gru_kernel,
        out_shape=jax.ShapeDtypeStruct((B, O), jnp.float32),
        in_specs=[vmem, vmem, vmem, vmem, vmem, vmem, vmem, smem],
        out_specs=vmem,
    )
    return kernel(
        x, h0,
        params["w_i"], params["w_h"], params["b_i"], params["b_hn"],
        params["w_lin"], params["b_lin"],
    )


def init_params(key, input_size, hidden_size, output_size):
    """Deterministic init mirroring PyTorch's uniform(-1/sqrt(H), 1/sqrt(H)).

    Weights are stored transposed (in_features, out_features) and gate-fused
    along the output axis in PyTorch's r/z/n order.
    """
    ks = jax.random.split(key, 12)
    bound = 1.0 / math.sqrt(hidden_size)

    def u(k, shape):
        return jax.random.uniform(k, shape, jnp.float32, -bound, bound)

    w_ir = u(ks[0], (input_size, hidden_size))
    w_iz = u(ks[1], (input_size, hidden_size))
    w_in = u(ks[2], (input_size, hidden_size))
    w_hr = u(ks[3], (hidden_size, hidden_size))
    w_hz = u(ks[4], (hidden_size, hidden_size))
    w_hn = u(ks[5], (hidden_size, hidden_size))
    b_ir, b_iz, b_in = (u(ks[6], (1, hidden_size)),
                        u(ks[7], (1, hidden_size)),
                        u(ks[8], (1, hidden_size)))
    b_hr, b_hz, b_hn = (u(ks[9], (1, hidden_size)),
                        u(ks[10], (1, hidden_size)),
                        u(ks[11], (1, hidden_size)))

    # Gate-fused parameters.
    w_i = jnp.concatenate([w_ir, w_iz, w_in], axis=1)          # (I, 3H)
    w_h = jnp.concatenate([w_hr, w_hz, w_hn], axis=1)          # (H, 3H)
    # b_ir+b_hr and b_iz+b_hz fold fully; b_in folds into the input projection;
    # b_hn must stay separate (it sits inside the r_t gating term).
    b_i = jnp.concatenate([b_ir + b_hr, b_iz + b_hz, b_in], axis=1)  # (1, 3H)

    klin_w, klin_b = jax.random.split(jax.random.fold_in(key, 123))
    lin_bound = 1.0 / math.sqrt(hidden_size)
    w_lin = jax.random.uniform(klin_w, (hidden_size, output_size), jnp.float32,
                               -lin_bound, lin_bound)
    b_lin = jax.random.uniform(klin_b, (1, output_size), jnp.float32,
                               -lin_bound, lin_bound)

    return {"w_i": w_i, "w_h": w_h, "b_i": b_i, "b_hn": b_hn,
            "w_lin": w_lin, "b_lin": b_lin}


def reference_forward(x, h0, params):
    """Pure-JAX reference of the same GRU math (sanity check)."""
    H = h0.shape[1]
    wi, wh = params["w_i"], params["w_h"]
    bi, b_hn = params["b_i"], params["b_hn"]

    def step(h, x_t):
        gi = x_t @ wi + bi        # (B, 3H)
        gh = h @ wh               # (B, 3H)
        r = jax.nn.sigmoid(gi[:, :H] + gh[:, :H])
        z = jax.nn.sigmoid(gi[:, H:2 * H] + gh[:, H:2 * H])
        n = jnp.tanh(gi[:, 2 * H:] + r * (gh[:, 2 * H:] + b_hn))
        h_new = (1.0 - z) * n + z * h
        return h_new, None

    h_final, _ = lax.scan(step, h0, jnp.transpose(x, (1, 0, 2)))
    return h_final @ params["w_lin"] + params["b_lin"]


if __name__ == "__main__":
    # Shapes implied by the module: batch=2, seq=8, input_size=10, hidden=32, out=1.
    B, T, I, H, O = 2, 8, 10, 32, 1

    key = jax.random.PRNGKey(0)
    k_x, k_h, k_p = jax.random.split(key, 3)

    x = jax.random.normal(k_x, (B, T, I), jnp.float32)   # batch_first input
    h0 = jax.random.normal(k_h, (B, H), jnp.float32)     # init_lstm_state (squeezed)
    params = init_params(k_p, I, H, O)

    out = gru_forward(x, h0, params)
    out = jax.block_until_ready(out)

    ref = reference_forward(x, h0, params)
    assert out.shape == (B, O)
    assert jnp.allclose(out, ref, atol=1e-5, rtol=1e-5), (out, ref)

    print("KERNEL_OK")
</pallas_src>

<mosaic_0001>
module attributes {stable_mosaic.version = 11 : i64} {
  func.func @gru_kernel(%arg0: memref<2x8x10xf32, #tpu.memory_space<vmem>>, %arg1: memref<2x32xf32, #tpu.memory_space<vmem>>, %arg2: memref<10x96xf32, #tpu.memory_space<vmem>>, %arg3: memref<32x96xf32, #tpu.memory_space<vmem>>, %arg4: memref<1x96xf32, #tpu.memory_space<vmem>>, %arg5: memref<1x32xf32, #tpu.memory_space<vmem>>, %arg6: memref<32x1xf32, #tpu.memory_space<vmem>>, %arg7: memref<1x1xf32, #tpu.memory_space<smem>>, %arg8: memref<2x1xf32, #tpu.memory_space<vmem>>) attributes {dimension_semantics = [], scalar_prefetch = 0 : i64, scratch_operands = 0 : i64, tpu.core_type = #tpu.core_type<tc>} {
    %c0 = arith.constant 0 : index
    %c0_0 = arith.constant 0 : index
    %c0_1 = arith.constant 0 : index
    %0 = vector.load %arg0[%c0, %c0_0, %c0_1] : memref<2x8x10xf32, #tpu.memory_space<vmem>>, vector<2x8x10xf32>
    %1 = vector.shape_cast %0 : vector<2x8x10xf32> to vector<16x10xf32>
    %c0_2 = arith.constant 0 : index
    %c0_3 = arith.constant 0 : index
    %2 = vector.load %arg2[%c0_2, %c0_3] : memref<10x96xf32, #tpu.memory_space<vmem>>, vector<10x96xf32>
    %cst = arith.constant dense<0.000000e+00> : vector<16x96xf32>
    %3 = tpu.matmul %1, %2, %cst {dimension_numbers = #tpu.dot_dimension_numbers<[1], [0], [0], [1], [0, 0, 1, 1], [], []>} : vector<16x10xf32>, vector<10x96xf32>, vector<16x96xf32> -> vector<16x96xf32>
    %c0_4 = arith.constant 0 : index
    %c0_5 = arith.constant 0 : index
    %4 = vector.load %arg4[%c0_4, %c0_5] : memref<1x96xf32, #tpu.memory_space<vmem>>, vector<1x96xf32>
    %5 = vector.broadcast %4 : vector<1x96xf32> to vector<16x96xf32>
    %6 = arith.addf %3, %5 : vector<16x96xf32>
    %7 = vector.shape_cast %6 : vector<16x96xf32> to vector<2x8x96xf32>
    %8 = vector.extract_strided_slice %7 {offsets = [0, 0, 0], sizes = [2, 1, 32], strides = [1, 1, 1]} : vector<2x8x96xf32> to vector<2x1x32xf32>
    %9 = vector.shape_cast %8 : vector<2x1x32xf32> to vector<2x32xf32>
    %10 = vector.extract_strided_slice %7 {offsets = [0, 1, 0], sizes = [2, 1, 32], strides = [1, 1, 1]} : vector<2x8x96xf32> to vector<2x1x32xf32>
    %11 = vector.shape_cast %10 : vector<2x1x32xf32> to vector<2x32xf32>
    %12 = vector.extract_strided_slice %7 {offsets = [0, 2, 0], sizes = [2, 1, 32], strides = [1, 1, 1]} : vector<2x8x96xf32> to vector<2x1x32xf32>
    %13 = vector.shape_cast %12 : vector<2x1x32xf32> to vector<2x32xf32>
    %14 = vector.extract_strided_slice %7 {offsets = [0, 3, 0], sizes = [2, 1, 32], strides = [1, 1, 1]} : vector<2x8x96xf32> to vector<2x1x32xf32>
    %15 = vector.shape_cast %14 : vector<2x1x32xf32> to vector<2x32xf32>
    %16 = vector.extract_strided_slice %7 {offsets = [0, 4, 0], sizes = [2, 1, 32], strides = [1, 1, 1]} : vector<2x8x96xf32> to vector<2x1x32xf32>
    %17 = vector.shape_cast %16 : vector<2x1x32xf32> to vector<2x32xf32>
    %18 = vector.extract_strided_slice %7 {offsets = [0, 5, 0], sizes = [2, 1, 32], strides = [1, 1, 1]} : vector<2x8x96xf32> to vector<2x1x32xf32>
    %19 = vector.shape_cast %18 : vector<2x1x32xf32> to vector<2x32xf32>
    %20 = vector.extract_strided_slice %7 {offsets = [0, 6, 0], sizes = [2, 1, 32], strides = [1, 1, 1]} : vector<2x8x96xf32> to vector<2x1x32xf32>
    %21 = vector.shape_cast %20 : vector<2x1x32xf32> to vector<2x32xf32>
    %22 = vector.extract_strided_slice %7 {offsets = [0, 7, 0], sizes = [2, 1, 32], strides = [1, 1, 1]} : vector<2x8x96xf32> to vector<2x1x32xf32>
    %23 = vector.shape_cast %22 : vector<2x1x32xf32> to vector<2x32xf32>
    %24 = vector.extract_strided_slice %7 {offsets = [0, 0, 32], sizes = [2, 1, 32], strides = [1, 1, 1]} : vector<2x8x96xf32> to vector<2x1x32xf32>
    %25 = vector.shape_cast %24 : vector<2x1x32xf32> to vector<2x32xf32>
    %26 = vector.extract_strided_slice %7 {offsets = [0, 1, 32], sizes = [2, 1, 32], strides = [1, 1, 1]} : vector<2x8x96xf32> to vector<2x1x32xf32>
    %27 = vector.shape_cast %26 : vector<2x1x32xf32> to vector<2x32xf32>
    %28 = vector.extract_strided_slice %7 {offsets = [0, 2, 32], sizes = [2, 1, 32], strides = [1, 1, 1]} : vector<2x8x96xf32> to vector<2x1x32xf32>
    %29 = vector.shape_cast %28 : vector<2x1x32xf32> to vector<2x32xf32>
    %30 = vector.extract_strided_slice %7 {offsets = [0, 3, 32], sizes = [2, 1, 32], strides = [1, 1, 1]} : vector<2x8x96xf32> to vector<2x1x32xf32>
    %31 = vector.shape_cast %30 : vector<2x1x32xf32> to vector<2x32xf32>
    %32 = vector.extract_strided_slice %7 {offsets = [0, 4, 32], sizes = [2, 1, 32], strides = [1, 1, 1]} : vector<2x8x96xf32> to vector<2x1x32xf32>
    %33 = vector.shape_cast %32 : vector<2x1x32xf32> to vector<2x32xf32>
    %34 = vector.extract_strided_slice %7 {offsets = [0, 5, 32], sizes = [2, 1, 32], strides = [1, 1, 1]} : vector<2x8x96xf32> to vector<2x1x32xf32>
    %35 = vector.shape_cast %34 : vector<2x1x32xf32> to vector<2x32xf32>
    %36 = vector.extract_strided_slice %7 {offsets = [0, 6, 32], sizes = [2, 1, 32], strides = [1, 1, 1]} : vector<2x8x96xf32> to vector<2x1x32xf32>
    %37 = vector.shape_cast %36 : vector<2x1x32xf32> to vector<2x32xf32>
    %38 = vector.extract_strided_slice %7 {offsets = [0, 7, 32], sizes = [2, 1, 32], strides = [1, 1, 1]} : vector<2x8x96xf32> to vector<2x1x32xf32>
    %39 = vector.shape_cast %38 : vector<2x1x32xf32> to vector<2x32xf32>
    %40 = vector.extract_strided_slice %7 {offsets = [0, 0, 64], sizes = [2, 1, 32], strides = [1, 1, 1]} : vector<2x8x96xf32> to vector<2x1x32xf32>
    %41 = vector.shape_cast %40 : vector<2x1x32xf32> to vector<2x32xf32>
    %42 = vector.extract_strided_slice %7 {offsets = [0, 1, 64], sizes = [2, 1, 32], strides = [1, 1, 1]} : vector<2x8x96xf32> to vector<2x1x32xf32>
    %43 = vector.shape_cast %42 : vector<2x1x32xf32> to vector<2x32xf32>
    %44 = vector.extract_strided_slice %7 {offsets = [0, 2, 64], sizes = [2, 1, 32], strides = [1, 1, 1]} : vector<2x8x96xf32> to vector<2x1x32xf32>
    %45 = vector.shape_cast %44 : vector<2x1x32xf32> to vector<2x32xf32>
    %46 = vector.extract_strided_slice %7 {offsets = [0, 3, 64], sizes = [2, 1, 32], strides = [1, 1, 1]} : vector<2x8x96xf32> to vector<2x1x32xf32>
    %47 = vector.shape_cast %46 : vector<2x1x32xf32> to vector<2x32xf32>
    %48 = vector.extract_strided_slice %7 {offsets = [0, 4, 64], sizes = [2, 1, 32], strides = [1, 1, 1]} : vector<2x8x96xf32> to vector<2x1x32xf32>
    %49 = vector.shape_cast %48 : vector<2x1x32xf32> to vector<2x32xf32>
    %50 = vector.extract_strided_slice %7 {offsets = [0, 5, 64], sizes = [2, 1, 32], strides = [1, 1, 1]} : vector<2x8x96xf32> to vector<2x1x32xf32>
    %51 = vector.shape_cast %50 : vector<2x1x32xf32> to vector<2x32xf32>
    %52 = vector.extract_strided_slice %7 {offsets = [0, 6, 64], sizes = [2, 1, 32], strides = [1, 1, 1]} : vector<2x8x96xf32> to vector<2x1x32xf32>
    %53 = vector.shape_cast %52 : vector<2x1x32xf32> to vector<2x32xf32>
    %54 = vector.extract_strided_slice %7 {offsets = [0, 7, 64], sizes = [2, 1, 32], strides = [1, 1, 1]} : vector<2x8x96xf32> to vector<2x1x32xf32>
    %55 = vector.shape_cast %54 : vector<2x1x32xf32> to vector<2x32xf32>
    %c0_6 = arith.constant 0 : index
    %c0_7 = arith.constant 0 : index
    %56 = vector.load %arg5[%c0_6, %c0_7] : memref<1x32xf32, #tpu.memory_space<vmem>>, vector<1x32xf32>
    %57 = vector.shape_cast %56 : vector<1x32xf32> to vector<1x32xf32>
    %58 = vector.broadcast %57 : vector<1x32xf32> to vector<2x32xf32>
    %c0_8 = arith.constant 0 : index
    %c0_9 = arith.constant 0 : index
    %59 = vector.load %arg3[%c0_8, %c0_9] : memref<32x96xf32, #tpu.memory_space<vmem>>, vector<32x96xf32>
    %c0_10 = arith.constant 0 : index
    %c0_11 = arith.constant 0 : index
    %60 = vector.load %arg1[%c0_10, %c0_11] : memref<2x32xf32, #tpu.memory_space<vmem>>, vector<2x32xf32>
    %cst_12 = arith.constant dense<0.000000e+00> : vector<2x96xf32>
    %61 = tpu.matmul %60, %59, %cst_12 {dimension_numbers = #tpu.dot_dimension_numbers<[1], [0], [0], [1], [0, 0, 1, 1], [], []>} : vector<2x32xf32>, vector<32x96xf32>, vector<2x96xf32> -> vector<2x96xf32>
    %62 = vector.extract_strided_slice %61 {offsets = [0, 0], sizes = [2, 32], strides = [1, 1]} : vector<2x96xf32> to vector<2x32xf32>
    %63 = arith.addf %9, %62 : vector<2x32xf32>
    %64 = arith.negf %63 : vector<2x32xf32>
    %65 = math.exp %64 : vector<2x32xf32>
    %cst_13 = arith.constant 1.000000e+00 : f32
    %66 = vector.broadcast %cst_13 : f32 to vector<2x32xf32>
    %67 = arith.addf %66, %65 : vector<2x32xf32>
    %68 = arith.divf %66, %67 : vector<2x32xf32>
    %69 = vector.extract_strided_slice %61 {offsets = [0, 32], sizes = [2, 32], strides = [1, 1]} : vector<2x96xf32> to vector<2x32xf32>
    %70 = arith.addf %25, %69 : vector<2x32xf32>
    %71 = arith.negf %70 : vector<2x32xf32>
    %72 = math.exp %71 : vector<2x32xf32>
    %cst_14 = arith.constant 1.000000e+00 : f32
    %73 = vector.broadcast %cst_14 : f32 to vector<2x32xf32>
    %74 = arith.addf %73, %72 : vector<2x32xf32>
    %75 = arith.divf %73, %74 : vector<2x32xf32>
    %76 = vector.extract_strided_slice %61 {offsets = [0, 64], sizes = [2, 32], strides = [1, 1]} : vector<2x96xf32> to vector<2x32xf32>
    %77 = arith.addf %76, %58 : vector<2x32xf32>
    %78 = arith.mulf %68, %77 : vector<2x32xf32>
    %79 = arith.addf %41, %78 : vector<2x32xf32>
    %80 = math.tanh %79 : vector<2x32xf32>
    %cst_15 = arith.constant 1.000000e+00 : f32
    %81 = vector.broadcast %cst_15 : f32 to vector<2x32xf32>
    %82 = arith.subf %81, %75 : vector<2x32xf32>
    %83 = arith.mulf %82, %80 : vector<2x32xf32>
    %84 = arith.mulf %75, %60 : vector<2x32xf32>
    %85 = arith.addf %83, %84 : vector<2x32xf32>
    %cst_16 = arith.constant dense<0.000000e+00> : vector<2x96xf32>
    %86 = tpu.matmul %85, %59, %cst_16 {dimension_numbers = #tpu.dot_dimension_numbers<[1], [0], [0], [1], [0, 0, 1, 1], [], []>} : vector<2x32xf32>, vector<32x96xf32>, vector<2x96xf32> -> vector<2x96xf32>
    %87 = vector.extract_strided_slice %86 {offsets = [0, 0], sizes = [2, 32], strides = [1, 1]} : vector<2x96xf32> to vector<2x32xf32>
    %88 = arith.addf %11, %87 : vector<2x32xf32>
    %89 = arith.negf %88 : vector<2x32xf32>
    %90 = math.exp %89 : vector<2x32xf32>
    %cst_17 = arith.constant 1.000000e+00 : f32
    %91 = vector.broadcast %cst_17 : f32 to vector<2x32xf32>
    %92 = arith.addf %91, %90 : vector<2x32xf32>
    %93 = arith.divf %91, %92 : vector<2x32xf32>
    %94 = vector.extract_strided_slice %86 {offsets = [0, 32], sizes = [2, 32], strides = [1, 1]} : vector<2x96xf32> to vector<2x32xf32>
    %95 = arith.addf %27, %94 : vector<2x32xf32>
    %96 = arith.negf %95 : vector<2x32xf32>
    %97 = math.exp %96 : vector<2x32xf32>
    %cst_18 = arith.constant 1.000000e+00 : f32
    %98 = vector.broadcast %cst_18 : f32 to vector<2x32xf32>
    %99 = arith.addf %98, %97 : vector<2x32xf32>
    %100 = arith.divf %98, %99 : vector<2x32xf32>
    %101 = vector.extract_strided_slice %86 {offsets = [0, 64], sizes = [2, 32], strides = [1, 1]} : vector<2x96xf32> to vector<2x32xf32>
    %102 = arith.addf %101, %58 : vector<2x32xf32>
    %103 = arith.mulf %93, %102 : vector<2x32xf32>
    %104 = arith.addf %43, %103 : vector<2x32xf32>
    %105 = math.tanh %104 : vector<2x32xf32>
    %cst_19 = arith.constant 1.000000e+00 : f32
    %106 = vector.broadcast %cst_19 : f32 to vector<2x32xf32>
    %107 = arith.subf %106, %100 : vector<2x32xf32>
    %108 = arith.mulf %107, %105 : vector<2x32xf32>
    %109 = arith.mulf %100, %85 : vector<2x32xf32>
    %110 = arith.addf %108, %109 : vector<2x32xf32>
    %cst_20 = arith.constant dense<0.000000e+00> : vector<2x96xf32>
    %111 = tpu.matmul %110, %59, %cst_20 {dimension_numbers = #tpu.dot_dimension_numbers<[1], [0], [0], [1], [0, 0, 1, 1], [], []>} : vector<2x32xf32>, vector<32x96xf32>, vector<2x96xf32> -> vector<2x96xf32>
    %112 = vector.extract_strided_slice %111 {offsets = [0, 0], sizes = [2, 32], strides = [1, 1]} : vector<2x96xf32> to vector<2x32xf32>
    %113 = arith.addf %13, %112 : vector<2x32xf32>
    %114 = arith.negf %113 : vector<2x32xf32>
    %115 = math.exp %114 : vector<2x32xf32>
    %cst_21 = arith.constant 1.000000e+00 : f32
    %116 = vector.broadcast %cst_21 : f32 to vector<2x32xf32>
    %117 = arith.addf %116, %115 : vector<2x32xf32>
    %118 = arith.divf %116, %117 : vector<2x32xf32>
    %119 = vector.extract_strided_slice %111 {offsets = [0, 32], sizes = [2, 32], strides = [1, 1]} : vector<2x96xf32> to vector<2x32xf32>
    %120 = arith.addf %29, %119 : vector<2x32xf32>
    %121 = arith.negf %120 : vector<2x32xf32>
    %122 = math.exp %121 : vector<2x32xf32>
    %cst_22 = arith.constant 1.000000e+00 : f32
    %123 = vector.broadcast %cst_22 : f32 to vector<2x32xf32>
    %124 = arith.addf %123, %122 : vector<2x32xf32>
    %125 = arith.divf %123, %124 : vector<2x32xf32>
    %126 = vector.extract_strided_slice %111 {offsets = [0, 64], sizes = [2, 32], strides = [1, 1]} : vector<2x96xf32> to vector<2x32xf32>
    %127 = arith.addf %126, %58 : vector<2x32xf32>
    %128 = arith.mulf %118, %127 : vector<2x32xf32>
    %129 = arith.addf %45, %128 : vector<2x32xf32>
    %130 = math.tanh %129 : vector<2x32xf32>
    %cst_23 = arith.constant 1.000000e+00 : f32
    %131 = vector.broadcast %cst_23 : f32 to vector<2x32xf32>
    %132 = arith.subf %131, %125 : vector<2x32xf32>
    %133 = arith.mulf %132, %130 : vector<2x32xf32>
    %134 = arith.mulf %125, %110 : vector<2x32xf32>
    %135 = arith.addf %133, %134 : vector<2x32xf32>
    %cst_24 = arith.constant dense<0.000000e+00> : vector<2x96xf32>
    %136 = tpu.matmul %135, %59, %cst_24 {dimension_numbers = #tpu.dot_dimension_numbers<[1], [0], [0], [1], [0, 0, 1, 1], [], []>} : vector<2x32xf32>, vector<32x96xf32>, vector<2x96xf32> -> vector<2x96xf32>
    %137 = vector.extract_strided_slice %136 {offsets = [0, 0], sizes = [2, 32], strides = [1, 1]} : vector<2x96xf32> to vector<2x32xf32>
    %138 = arith.addf %15, %137 : vector<2x32xf32>
    %139 = arith.negf %138 : vector<2x32xf32>
    %140 = math.exp %139 : vector<2x32xf32>
    %cst_25 = arith.constant 1.000000e+00 : f32
    %141 = vector.broadcast %cst_25 : f32 to vector<2x32xf32>
    %142 = arith.addf %141, %140 : vector<2x32xf32>
    %143 = arith.divf %141, %142 : vector<2x32xf32>
    %144 = vector.extract_strided_slice %136 {offsets = [0, 32], sizes = [2, 32], strides = [1, 1]} : vector<2x96xf32> to vector<2x32xf32>
    %145 = arith.addf %31, %144 : vector<2x32xf32>
    %146 = arith.negf %145 : vector<2x32xf32>
    %147 = math.exp %146 : vector<2x32xf32>
    %cst_26 = arith.constant 1.000000e+00 : f32
    %148 = vector.broadcast %cst_26 : f32 to vector<2x32xf32>
    %149 = arith.addf %148, %147 : vector<2x32xf32>
    %150 = arith.divf %148, %149 : vector<2x32xf32>
    %151 = vector.extract_strided_slice %136 {offsets = [0, 64], sizes = [2, 32], strides = [1, 1]} : vector<2x96xf32> to vector<2x32xf32>
    %152 = arith.addf %151, %58 : vector<2x32xf32>
    %153 = arith.mulf %143, %152 : vector<2x32xf32>
    %154 = arith.addf %47, %153 : vector<2x32xf32>
    %155 = math.tanh %154 : vector<2x32xf32>
    %cst_27 = arith.constant 1.000000e+00 : f32
    %156 = vector.broadcast %cst_27 : f32 to vector<2x32xf32>
    %157 = arith.subf %156, %150 : vector<2x32xf32>
    %158 = arith.mulf %157, %155 : vector<2x32xf32>
    %159 = arith.mulf %150, %135 : vector<2x32xf32>
    %160 = arith.addf %158, %159 : vector<2x32xf32>
    %cst_28 = arith.constant dense<0.000000e+00> : vector<2x96xf32>
    %161 = tpu.matmul %160, %59, %cst_28 {dimension_numbers = #tpu.dot_dimension_numbers<[1], [0], [0], [1], [0, 0, 1, 1], [], []>} : vector<2x32xf32>, vector<32x96xf32>, vector<2x96xf32> -> vector<2x96xf32>
    %162 = vector.extract_strided_slice %161 {offsets = [0, 0], sizes = [2, 32], strides = [1, 1]} : vector<2x96xf32> to vector<2x32xf32>
    %163 = arith.addf %17, %162 : vector<2x32xf32>
    %164 = arith.negf %163 : vector<2x32xf32>
    %165 = math.exp %164 : vector<2x32xf32>
    %cst_29 = arith.constant 1.000000e+00 : f32
    %166 = vector.broadcast %cst_29 : f32 to vector<2x32xf32>
    %167 = arith.addf %166, %165 : vector<2x32xf32>
    %168 = arith.divf %166, %167 : vector<2x32xf32>
    %169 = vector.extract_strided_slice %161 {offsets = [0, 32], sizes = [2, 32], strides = [1, 1]} : vector<2x96xf32> to vector<2x32xf32>
    %170 = arith.addf %33, %169 : vector<2x32xf32>
    %171 = arith.negf %170 : vector<2x32xf32>
    %172 = math.exp %171 : vector<2x32xf32>
    %cst_30 = arith.constant 1.000000e+00 : f32
    %173 = vector.broadcast %cst_30 : f32 to vector<2x32xf32>
    %174 = arith.addf %173, %172 : vector<2x32xf32>
    %175 = arith.divf %173, %174 : vector<2x32xf32>
    %176 = vector.extract_strided_slice %161 {offsets = [0, 64], sizes = [2, 32], strides = [1, 1]} : vector<2x96xf32> to vector<2x32xf32>
    %177 = arith.addf %176, %58 : vector<2x32xf32>
    %178 = arith.mulf %168, %177 : vector<2x32xf32>
    %179 = arith.addf %49, %178 : vector<2x32xf32>
    %180 = math.tanh %179 : vector<2x32xf32>
    %cst_31 = arith.constant 1.000000e+00 : f32
    %181 = vector.broadcast %cst_31 : f32 to vector<2x32xf32>
    %182 = arith.subf %181, %175 : vector<2x32xf32>
    %183 = arith.mulf %182, %180 : vector<2x32xf32>
    %184 = arith.mulf %175, %160 : vector<2x32xf32>
    %185 = arith.addf %183, %184 : vector<2x32xf32>
    %cst_32 = arith.constant dense<0.000000e+00> : vector<2x96xf32>
    %186 = tpu.matmul %185, %59, %cst_32 {dimension_numbers = #tpu.dot_dimension_numbers<[1], [0], [0], [1], [0, 0, 1, 1], [], []>} : vector<2x32xf32>, vector<32x96xf32>, vector<2x96xf32> -> vector<2x96xf32>
    %187 = vector.extract_strided_slice %186 {offsets = [0, 0], sizes = [2, 32], strides = [1, 1]} : vector<2x96xf32> to vector<2x32xf32>
    %188 = arith.addf %19, %187 : vector<2x32xf32>
    %189 = arith.negf %188 : vector<2x32xf32>
    %190 = math.exp %189 : vector<2x32xf32>
    %cst_33 = arith.constant 1.000000e+00 : f32
    %191 = vector.broadcast %cst_33 : f32 to vector<2x32xf32>
    %192 = arith.addf %191, %190 : vector<2x32xf32>
    %193 = arith.divf %191, %192 : vector<2x32xf32>
    %194 = vector.extract_strided_slice %186 {offsets = [0, 32], sizes = [2, 32], strides = [1, 1]} : vector<2x96xf32> to vector<2x32xf32>
    %195 = arith.addf %35, %194 : vector<2x32xf32>
    %196 = arith.negf %195 : vector<2x32xf32>
    %197 = math.exp %196 : vector<2x32xf32>
    %cst_34 = arith.constant 1.000000e+00 : f32
    %198 = vector.broadcast %cst_34 : f32 to vector<2x32xf32>
    %199 = arith.addf %198, %197 : vector<2x32xf32>
    %200 = arith.divf %198, %199 : vector<2x32xf32>
    %201 = vector.extract_strided_slice %186 {offsets = [0, 64], sizes = [2, 32], strides = [1, 1]} : vector<2x96xf32> to vector<2x32xf32>
    %202 = arith.addf %201, %58 : vector<2x32xf32>
    %203 = arith.mulf %193, %202 : vector<2x32xf32>
    %204 = arith.addf %51, %203 : vector<2x32xf32>
    %205 = math.tanh %204 : vector<2x32xf32>
    %cst_35 = arith.constant 1.000000e+00 : f32
    %206 = vector.broadcast %cst_35 : f32 to vector<2x32xf32>
    %207 = arith.subf %206, %200 : vector<2x32xf32>
    %208 = arith.mulf %207, %205 : vector<2x32xf32>
    %209 = arith.mulf %200, %185 : vector<2x32xf32>
    %210 = arith.addf %208, %209 : vector<2x32xf32>
    %cst_36 = arith.constant dense<0.000000e+00> : vector<2x96xf32>
    %211 = tpu.matmul %210, %59, %cst_36 {dimension_numbers = #tpu.dot_dimension_numbers<[1], [0], [0], [1], [0, 0, 1, 1], [], []>} : vector<2x32xf32>, vector<32x96xf32>, vector<2x96xf32> -> vector<2x96xf32>
    %212 = vector.extract_strided_slice %211 {offsets = [0, 0], sizes = [2, 32], strides = [1, 1]} : vector<2x96xf32> to vector<2x32xf32>
    %213 = arith.addf %21, %212 : vector<2x32xf32>
    %214 = arith.negf %213 : vector<2x32xf32>
    %215 = math.exp %214 : vector<2x32xf32>
    %cst_37 = arith.constant 1.000000e+00 : f32
    %216 = vector.broadcast %cst_37 : f32 to vector<2x32xf32>
    %217 = arith.addf %216, %215 : vector<2x32xf32>
    %218 = arith.divf %216, %217 : vector<2x32xf32>
    %219 = vector.extract_strided_slice %211 {offsets = [0, 32], sizes = [2, 32], strides = [1, 1]} : vector<2x96xf32> to vector<2x32xf32>
    %220 = arith.addf %37, %219 : vector<2x32xf32>
    %221 = arith.negf %220 : vector<2x32xf32>
    %222 = math.exp %221 : vector<2x32xf32>
    %cst_38 = arith.constant 1.000000e+00 : f32
    %223 = vector.broadcast %cst_38 : f32 to vector<2x32xf32>
    %224 = arith.addf %223, %222 : vector<2x32xf32>
    %225 = arith.divf %223, %224 : vector<2x32xf32>
    %226 = vector.extract_strided_slice %211 {offsets = [0, 64], sizes = [2, 32], strides = [1, 1]} : vector<2x96xf32> to vector<2x32xf32>
    %227 = arith.addf %226, %58 : vector<2x32xf32>
    %228 = arith.mulf %218, %227 : vector<2x32xf32>
    %229 = arith.addf %53, %228 : vector<2x32xf32>
    %230 = math.tanh %229 : vector<2x32xf32>
    %cst_39 = arith.constant 1.000000e+00 : f32
    %231 = vector.broadcast %cst_39 : f32 to vector<2x32xf32>
    %232 = arith.subf %231, %225 : vector<2x32xf32>
    %233 = arith.mulf %232, %230 : vector<2x32xf32>
    %234 = arith.mulf %225, %210 : vector<2x32xf32>
    %235 = arith.addf %233, %234 : vector<2x32xf32>
    %cst_40 = arith.constant dense<0.000000e+00> : vector<2x96xf32>
    %236 = tpu.matmul %235, %59, %cst_40 {dimension_numbers = #tpu.dot_dimension_numbers<[1], [0], [0], [1], [0, 0, 1, 1], [], []>} : vector<2x32xf32>, vector<32x96xf32>, vector<2x96xf32> -> vector<2x96xf32>
    %237 = vector.extract_strided_slice %236 {offsets = [0, 0], sizes = [2, 32], strides = [1, 1]} : vector<2x96xf32> to vector<2x32xf32>
    %238 = arith.addf %23, %237 : vector<2x32xf32>
    %239 = arith.negf %238 : vector<2x32xf32>
    %240 = math.exp %239 : vector<2x32xf32>
    %cst_41 = arith.constant 1.000000e+00 : f32
    %241 = vector.broadcast %cst_41 : f32 to vector<2x32xf32>
    %242 = arith.addf %241, %240 : vector<2x32xf32>
    %243 = arith.divf %241, %242 : vector<2x32xf32>
    %244 = vector.extract_strided_slice %236 {offsets = [0, 32], sizes = [2, 32], strides = [1, 1]} : vector<2x96xf32> to vector<2x32xf32>
    %245 = arith.addf %39, %244 : vector<2x32xf32>
    %246 = arith.negf %245 : vector<2x32xf32>
    %247 = math.exp %246 : vector<2x32xf32>
    %cst_42 = arith.constant 1.000000e+00 : f32
    %248 = vector.broadcast %cst_42 : f32 to vector<2x32xf32>
    %249 = arith.addf %248, %247 : vector<2x32xf32>
    %250 = arith.divf %248, %249 : vector<2x32xf32>
    %251 = vector.extract_strided_slice %236 {offsets = [0, 64], sizes = [2, 32], strides = [1, 1]} : vector<2x96xf32> to vector<2x32xf32>
    %252 = arith.addf %251, %58 : vector<2x32xf32>
    %253 = arith.mulf %243, %252 : vector<2x32xf32>
    %254 = arith.addf %55, %253 : vector<2x32xf32>
    %255 = math.tanh %254 : vector<2x32xf32>
    %cst_43 = arith.constant 1.000000e+00 : f32
    %256 = vector.broadcast %cst_43 : f32 to vector<2x32xf32>
    %257 = arith.subf %256, %250 : vector<2x32xf32>
    %258 = arith.mulf %257, %255 : vector<2x32xf32>
    %259 = arith.mulf %250, %235 : vector<2x32xf32>
    %260 = arith.addf %258, %259 : vector<2x32xf32>
    %c0_44 = arith.constant 0 : index
    %c0_45 = arith.constant 0 : index
    %261 = vector.load %arg6[%c0_44, %c0_45] : memref<32x1xf32, #tpu.memory_space<vmem>>, vector<32x1xf32>
    %cst_46 = arith.constant dense<0.000000e+00> : vector<2x1xf32>
    %262 = tpu.matmul %260, %261, %cst_46 {dimension_numbers = #tpu.dot_dimension_numbers<[1], [0], [0], [1], [0, 0, 1, 1], [], []>} : vector<2x32xf32>, vector<32x1xf32>, vector<2x1xf32> -> vector<2x1xf32>
    %c0_47 = arith.constant 0 : index
    %c0_48 = arith.constant 0 : index
    %263 = memref.load %arg7[%c0_47, %c0_48] : memref<1x1xf32, #tpu.memory_space<smem>>
    %264 = vector.broadcast %263 : f32 to vector<2x1xf32>
    %265 = arith.addf %262, %264 : vector<2x1xf32>
    %c0_49 = arith.constant 0 : index
    %c0_50 = arith.constant 0 : index
    %266 = vector.load %arg8[%c0_49, %c0_50] : memref<2x1xf32, #tpu.memory_space<vmem>>, vector<2x1xf32>
    tpu.vector_store %arg8[%c0_49, %c0_50], %265 {strides = array<i32>} : memref<2x1xf32, #tpu.memory_space<vmem>>, vector<2x1xf32>,
    return
  }
}

</mosaic_0001>

<llo_original>
// kernel: tpu_custom_call.1
$region0: #{tpu_custom_call.1}
  #allocation0 [shape = 'u32[]', space=smem, size = 0x4, offset = 0x4, fixed_abs, tag = 'smem constant byte address 0x4 - core index']
  #allocation1 [shape = 'u32[144,128]{1,0:T(1,128)}', space=vmem, size = 0x12000, scoped, tag = 'internal scratch']
  #allocation2 [shape = 'f32[1,1]{1,0:T(1,128)S(6)}', space=smem, size = 0x200, scoped, tag = 'scoped memory for tpu_custom_call.1']
  %s0 = inlined_call_operand.hbm [shape: f32[2,8,10], index: 0, kind: input, shape index: {}]
  %s1 = inlined_call_operand.vmem [shape: f32[2,32], index: 1, kind: input, shape index: {}]
  %s2 = inlined_call_operand.hbm [shape: f32[10,96], index: 2, kind: input, shape index: {}]
  %s3 = inlined_call_operand.vmem [shape: f32[32,96], index: 3, kind: input, shape index: {}]
  %s4 = inlined_call_operand.vmem [shape: f32[1,96], index: 4, kind: input, shape index: {}]
  %s5 = inlined_call_operand.vmem [shape: f32[1,32], index: 5, kind: input, shape index: {}]
  %s6 = inlined_call_operand.vmem [shape: f32[32,1], index: 6, kind: input, shape index: {}]
  %s7 = inlined_call_operand.<no memory space> [shape: f32[1,1], index: 7, kind: input, shape index: {}]
  %s8 = inlined_call_operand.vmem [shape: f32[2,1], index: 8, kind: output, shape index: {}]
  %s9 = sld [smem:[#allocation0]]
  $region50: #{tpu_custom_call.1} parent=0
    _
  %s11 = ssub.s32 1, %s9
  %s12 = scalar_select 0, %s11, %s9
  %13 = sst [smem:[#allocation2]] %s7
  $region1: #{tpu_custom_call.1} parent=0
    #allocation3 [shape = 'u8[8192]{0}', space=vmem, size = 0x2000, scoped, tag = 'input window, operand 0, single buffered']
    #allocation4 [shape = 's32[1]{0}', space=sflag, size = 0x4, scoped, tag = 'scoped memory for tpu_custom_call.1']
    #allocation5 [shape = 'u8[8192]{0}', space=vmem, size = 0x2000, scoped, tag = 'input window, operand 2, single buffered']
    #allocation6 [shape = 's32[1]{0}', space=sflag, size = 0x4, scoped, tag = 'scoped memory for tpu_custom_call.1']
    %14 = vsyncpa [#allocation4], 0
    %15 = vsyncpa [#allocation6], 0
    // Predicated region
    $region2: #{tpu_custom_call.1} parent=1 // pred_check
      _
    $region3: #{tpu_custom_call.1} parent=1 // pred_check_branch
      %17 = sbr.rel (0) target = $region5
    $region4: #{tpu_custom_call.1} parent=1 // pred_region
      %s19 = ssub.s32 256, 256
      %20 = vsyncadd [#allocation4], %s19
      %s21 = sshll.u32 [#allocation3], 4
      %s22 = int_to_ptr.vmem [resolvable:$true] %s21
      %27 = dma.hbm_to_vmem [thread:$0]  %s0, 256, %s22, [#allocation4], 128, 128, 8
    $region5: #{tpu_custom_call.1} parent=1 // pred_fallthru
      _
    // Predicated region
    $region6: #{tpu_custom_call.1} parent=1 // pred_check
      _
    $region7: #{tpu_custom_call.1} parent=1 // pred_check_branch
      %29 = sbr.rel (0) target = $region9
    $region8: #{tpu_custom_call.1} parent=1 // pred_region
      _
    $region9: #{tpu_custom_call.1} parent=1 // pred_fallthru
      _
    // Predicated region
    $region10: #{tpu_custom_call.1} parent=1 // pred_check
      _
    $region11: #{tpu_custom_call.1} parent=1 // pred_check_branch
      %31 = sbr.rel (0) target = $region13
    $region12: #{tpu_custom_call.1} parent=1 // pred_region
      %s33 = ssub.s32 256, 256
      %34 = vsyncadd [#allocation6], %s33
      %s35 = sshll.u32 [#allocation5], 4
      %s36 = int_to_ptr.vmem [resolvable:$true] %s35
      %41 = dma.hbm_to_vmem [thread:$0]  %s2, 256, %s36, [#allocation6], 128, 128, 8
    $region13: #{tpu_custom_call.1} parent=1 // pred_fallthru
      _
    // Predicated region
    $region14: #{tpu_custom_call.1} parent=1 // pred_check
      _
    $region15: #{tpu_custom_call.1} parent=1 // pred_check_branch
      %43 = sbr.rel (0) target = $region17
    $region16: #{tpu_custom_call.1} parent=1 // pred_region
      _
    $region17: #{tpu_custom_call.1} parent=1 // pred_fallthru
      _
    // Predicated region
    $region18: #{tpu_custom_call.1} parent=1 // pred_check
      _
    $region19: #{tpu_custom_call.1} parent=1 // pred_check_branch
      %45 = sbr.rel (0) target = $region21
    $region20: #{tpu_custom_call.1} parent=1 // pred_region
      _
    $region21: #{tpu_custom_call.1} parent=1 // pred_fallthru
      _
    // Predicated region
    $region22: #{tpu_custom_call.1} parent=1 // pred_check
      _
    $region23: #{tpu_custom_call.1} parent=1 // pred_check_branch
      %47 = sbr.rel (0) target = $region25
    $region24: #{tpu_custom_call.1} parent=1 // pred_region
      _
    $region25: #{tpu_custom_call.1} parent=1 // pred_fallthru
      _
    // Predicated region
    $region26: #{tpu_custom_call.1} parent=1 // pred_check
      _
    $region27: #{tpu_custom_call.1} parent=1 // pred_check_branch
      %49 = sbr.rel (0) target = $region29
    $region28: #{tpu_custom_call.1} parent=1 // pred_region
      _
    $region29: #{tpu_custom_call.1} parent=1 // pred_fallthru
      _
    // Predicated region
    $region30: #{tpu_custom_call.1} parent=1 // pred_check
      _
    $region31: #{tpu_custom_call.1} parent=1 // pred_check_branch
      %51 = sbr.rel (0) target = $region33
    $region32: #{tpu_custom_call.1} parent=1 // pred_region
      _
    $region33: #{tpu_custom_call.1} parent=1 // pred_fallthru
      _
    // Predicated region
    $region34: #{tpu_custom_call.1} parent=1 // pred_check
      _
    $region35: #{tpu_custom_call.1} parent=1 // pred_check_branch
      %53 = sbr.rel (0) target = $region37
    $region36: #{tpu_custom_call.1} parent=1 // pred_region
      %54 = dma.done [#allocation4], 256
    $region37: #{tpu_custom_call.1} parent=1 // pred_fallthru
      _
    // Predicated region
    $region38: #{tpu_custom_call.1} parent=1 // pred_check
      _
    $region39: #{tpu_custom_call.1} parent=1 // pred_check_branch
      %56 = sbr.rel (0) target = $region41
    $region40: #{tpu_custom_call.1} parent=1 // pred_region
      %57 = dma.done [#allocation6], 256
    $region41: #{tpu_custom_call.1} parent=1 // pred_fallthru
      _
    %v58 = vld [vmem:[#allocation3] sm:$0xff]
    %v59 = vld [vmem:[#allocation3 + $0x8] sm:$0xff]
    %v60 = vld [vmem:[#allocation5] sm:$0xff]
    %v61 = vld [vmem:[#allocation5 + $0x8] sm:$0x3]
    %v62 = vld [vmem:[%s4] sm:$0x1]
    %v64 = vlaneseq
    %v65 = vshrl.u32 %v64, 7
    %v66 = vsub.s32 0, %v65
    %v67 = vrot.slane %v62, %v66
    %vm69 = vcmask 80896
    %v71 = vsel %vm69, %v58, 0
    %v74 = vsel %vm69, %v59, 0
    %vm76 = vcmask 1041408
    %v78 = vsel %vm76, %v61, 0
    %80 = vmatprep.subr.mxu0 0.0
    %81 = vmatpush1.msra.mxu0 0.0
    %82 = vmatprep.subr.mxu0 0.0
    %83 = vmatpush1.msra.mxu0 0.0
    %84 = vmatprep.subr.mxu0 0.0
    %85 = vmatpush1.msra.mxu0 0.0
    %86 = vmatprep.subr.mxu0 0.0
    %87 = vmatpush1.msra.mxu0 0.0
    %88 = vmatprep.subr.mxu0 0.0
    %89 = vmatpush1.msra.mxu0 0.0
    %90 = vmatprep.subr.mxu0 0.0
    %91 = vmatpush1.msra.mxu0 0.0
    %92 = vmatprep.subr.mxu0 0.0
    %93 = vmatpush1.msra.mxu0 0.0
    %94 = vmatprep.subr.mxu0 0.0
    %95 = vmatpush1.msra.mxu0 0.0
    %96 = vmatprep.subr.mxu0 0.0
    %97 = vmatpush1.msra.mxu0 0.0
    %98 = vmatprep.subr.mxu0 0.0
    %99 = vmatpush1.msra.mxu0 0.0
    %100 = vmatprep.subr.mxu0 0.0
    %101 = vmatpush1.msra.mxu0 0.0
    %102 = vmatprep.subr.mxu0 0.0
    %103 = vmatpush1.msra.mxu0 0.0
    %104 = vmatprep.subr.mxu0 0.0
    %105 = vmatpush1.msra.mxu0 0.0
    %106 = vmatprep.subr.mxu0 0.0
    %107 = vmatpush1.msra.mxu0 0.0
    %108 = vmatprep.subr.mxu0 0.0
    %109 = vmatpush1.msra.mxu0 %v78
    %110 = vmatprep.subr.mxu0 0.0
    %111 = vmatpush1.msra.mxu0 %v60
    %112 = vmatprep.subr.mxu0 0.0
    %113 = vmatpush2.msra.mxu0 0.0
    %114 = vmatprep.subr.mxu0 0.0
    %115 = vmatpush2.msra.mxu0 0.0
    %116 = vmatprep.subr.mxu0 0.0
    %117 = vmatpush2.msra.mxu0 0.0
    %118 = vmatprep.subr.mxu0 0.0
    %119 = vmatpush2.msra.mxu0 0.0
    %120 = vmatprep.subr.mxu0 0.0
    %121 = vmatpush2.msra.mxu0 0.0
    %122 = vmatprep.subr.mxu0 0.0
    %123 = vmatpush2.msra.mxu0 0.0
    %124 = vmatprep.subr.mxu0 0.0
    %125 = vmatpush2.msra.mxu0 0.0
    %126 = vmatprep.subr.mxu0 0.0
    %127 = vmatpush2.msra.mxu0 0.0
    %128 = vmatprep.subr.mxu0 0.0
    %129 = vmatpush2.msra.mxu0 0.0
    %130 = vmatprep.subr.mxu0 0.0
    %131 = vmatpush2.msra.mxu0 0.0
    %132 = vmatprep.subr.mxu0 0.0
    %133 = vmatpush2.msra.mxu0 0.0
    %134 = vmatprep.subr.mxu0 0.0
    %135 = vmatpush2.msra.mxu0 0.0
    %136 = vmatprep.subr.mxu0 0.0
    %137 = vmatpush2.msra.mxu0 0.0
    %138 = vmatprep.subr.mxu0 0.0
    %139 = vmatpush2.msra.mxu0 0.0
    %140 = vmatprep.subr.mxu0 0.0
    %141 = vmatpush2.msra.mxu0 0.0
    %142 = vmatprep.subr.mxu0 0.0
    %143 = vmatpush2.msra.mxu0 0.0
    %144 = vmatprep.mubr.f32.mxu0 0.0
    %145 = vmatmul.mubr.f32.gmra.mxu0 %v71
    %v146 = vpop.f32.mrf.mxu0
    %v147 = vadd.f32 %v67, %v146
    %v148 = vpop.f32.mrf.mxu0
    %149 = vmatprep.mubr.f32.mxu0 0.0
    %150 = vmatmul.mubr.f32.gmra.mxu0 %v74
    %v151 = vpop.f32.mrf.mxu0
    %v152 = vadd.f32 %v67, %v151
    %v153 = vpop.f32.mrf.mxu0
    %154 = vdwg.mxu0
    %v155 = vld [vmem:[%s5] sm:$0x1]
    %v157 = vlaneseq
    %v158 = vshrl.u32 %v157, 7
    %v159 = vsub.s32 0, %v158
    %v160 = vrot.slane %v155, %v159
    %v161 = vld [vmem:[%s3] sm:$0xff]
    %v162 = vld [vmem:[%s3 + $0x8] sm:$0xff]
    %v163 = vld [vmem:[%s3 + $0x10] sm:$0xff]
    %v164 = vld [vmem:[%s3 + $0x18] sm:$0xff]
    %v165 = vld [vmem:[%s1] sm:$0x3]
    %vm166 = vcmask 261120
    %v168 = vsel %vm166, %v165, 0
    %170 = vmatprep.subr.mxu0 0.0
    %171 = vmatpush1.msra.mxu0 0.0
    %172 = vmatprep.subr.mxu0 0.0
    %173 = vmatpush1.msra.mxu0 0.0
    %174 = vmatprep.subr.mxu0 0.0
    %175 = vmatpush1.msra.mxu0 0.0
    %176 = vmatprep.subr.mxu0 0.0
    %177 = vmatpush1.msra.mxu0 0.0
    %178 = vmatprep.subr.mxu0 0.0
    %179 = vmatpush1.msra.mxu0 0.0
    %180 = vmatprep.subr.mxu0 0.0
    %181 = vmatpush1.msra.mxu0 0.0
    %182 = vmatprep.subr.mxu0 0.0
    %183 = vmatpush1.msra.mxu0 0.0
    %184 = vmatprep.subr.mxu0 0.0
    %185 = vmatpush1.msra.mxu0 0.0
    %186 = vmatprep.subr.mxu0 0.0
    %187 = vmatpush1.msra.mxu0 0.0
    %188 = vmatprep.subr.mxu0 0.0
    %189 = vmatpush1.msra.mxu0 0.0
    %190 = vmatprep.subr.mxu0 0.0
    %191 = vmatpush1.msra.mxu0 0.0
    %192 = vmatprep.subr.mxu0 0.0
    %193 = vmatpush1.msra.mxu0 0.0
    %194 = vmatprep.subr.mxu0 0.0
    %195 = vmatpush1.msra.mxu0 %v164
    %196 = vmatprep.subr.mxu0 0.0
    %197 = vmatpush1.msra.mxu0 %v163
    %198 = vmatprep.subr.mxu0 0.0
    %199 = vmatpush1.msra.mxu0 %v162
    %200 = vmatprep.subr.mxu0 0.0
    %201 = vmatpush1.msra.mxu0 %v161
    %202 = vmatprep.subr.mxu0 0.0
    %203 = vmatpush2.msra.mxu0 0.0
    %204 = vmatprep.subr.mxu0 0.0
    %205 = vmatpush2.msra.mxu0 0.0
    %206 = vmatprep.subr.mxu0 0.0
    %207 = vmatpush2.msra.mxu0 0.0
    %208 = vmatprep.subr.mxu0 0.0
    %209 = vmatpush2.msra.mxu0 0.0
    %210 = vmatprep.subr.mxu0 0.0
    %211 = vmatpush2.msra.mxu0 0.0
    %212 = vmatprep.subr.mxu0 0.0
    %213 = vmatpush2.msra.mxu0 0.0
    %214 = vmatprep.subr.mxu0 0.0
    %215 = vmatpush2.msra.mxu0 0.0
    %216 = vmatprep.subr.mxu0 0.0
    %217 = vmatpush2.msra.mxu0 0.0
    %218 = vmatprep.subr.mxu0 0.0
    %219 = vmatpush2.msra.mxu0 0.0
    %220 = vmatprep.subr.mxu0 0.0
    %221 = vmatpush2.msra.mxu0 0.0
    %222 = vmatprep.subr.mxu0 0.0
    %223 = vmatpush2.msra.mxu0 0.0
    %224 = vmatprep.subr.mxu0 0.0
    %225 = vmatpush2.msra.mxu0 0.0
    %226 = vmatprep.subr.mxu0 0.0
    %227 = vmatpush2.msra.mxu0 0.0
    %228 = vmatprep.subr.mxu0 0.0
    %229 = vmatpush2.msra.mxu0 0.0
    %230 = vmatprep.subr.mxu0 0.0
    %231 = vmatpush2.msra.mxu0 0.0
    %232 = vmatprep.subr.mxu0 0.0
    %233 = vmatpush2.msra.mxu0 0.0
    %234 = vmatprep.mubr.f32.mxu0 0.0
    %235 = vmatmul.mubr.f32.gmra.mxu0 %v168
    %v236 = vpop.f32.mrf.mxu0
    %v237 = vadd.f32 0.0, %v236
    %v238 = vpop.f32.mrf.mxu0
    %239 = vdwg.mxu0
    %v241 = vrot.slane %v237, 1
    %v244 = vadd.f32 %v147, %v237
    %v245 = vadd.f32 %v152, %v241
    %v246 = vxor.u32 %v244, 2147483648
    %v247 = vxor.u32 %v245, 2147483648
    %v248 = vmul.f32 %v246, 1.442695
    %v249 = vpow.pop %v248
    %v250 = vmul.f32 %v247, 1.442695
    %v251 = vpow.pop %v250
    %v252 = vadd.f32 %v249, 1.0
    %v253 = vadd.f32 %v251, 1.0
    %v254 = vrcp.pop %v252
    %v255 = vmul.f32 1.0, %v254
    %v256 = vrcp.pop %v253
    %v257 = vmul.f32 1.0, %v256
    %258 = vrot.lane.b32.xlu0 %v160, 64
    %v259 = vpop.permute.xlu0 %258
    %v261 = vadd.f32 %v237, %v259
    %v263 = vrot.slane %v261, 1
    %264 = vrot.lane.b32.xlu0 %v261, 64
    %v265 = vpop.permute.xlu0 %264
    %266 = vrot.lane.b32.xlu0 %v263, 64
    %v267 = vpop.permute.xlu0 %266
    %v270 = vmul.f32 %v255, %v265
    %v271 = vmul.f32 %v257, %v267
    %274 = vrot.lane.b32.xlu0 %v270, 64
    %v275 = vpop.permute.xlu0 %274
    %276 = vrot.lane.b32.xlu0 %v271, 64
    %v277 = vpop.permute.xlu0 %276
    %v280 = vadd.f32 %v147, %v275
    %v281 = vadd.f32 %v152, %v277
    %v282 = vtanh.pop %v280
    %v283 = vtanh.pop %v281
    %v284 = vsub.f32 1.0, %v255
    %v285 = vsub.f32 1.0, %v257
    %288 = vrot.lane.b32.xlu0 %v282, 96
    %v289 = vpop.permute.xlu0 %288
    %290 = vrot.lane.b32.xlu0 %v283, 96
    %v291 = vpop.permute.xlu0 %290
    %v294 = vmul.f32 %v284, %v289
    %v295 = vmul.f32 %v285, %v291
    %v296 = vrot.slane %v165, 1
    %297 = vrot.lane.b32.xlu0 %v165, 32
    %v298 = vpop.permute.xlu0 %297
    %299 = vrot.lane.b32.xlu0 %v296, 32
    %v300 = vpop.permute.xlu0 %299
    %v303 = vmul.f32 %v255, %v298
    %v304 = vmul.f32 %v257, %v300
    %v305 = vadd.f32 %v294, %v303
    %v306 = vadd.f32 %v295, %v304
    %v309 = vrot.slane %v306, 7
    %vm310 = vcmask 1041409
    %v311 = vsel %vm310, %v309, %v305
    %312 = vrot.lane.b32.xlu0 %v311, 96
    %v313 = vpop.permute.xlu0 %312
    %v314 = vsel %vm166, %v313, 0
    %316 = vmatprep.subr.mxu0 0.0
    %317 = vmatpush1.msra.mxu0 0.0
    %318 = vmatprep.subr.mxu0 0.0
    %319 = vmatpush1.msra.mxu0 0.0
    %320 = vmatprep.subr.mxu0 0.0
    %321 = vmatpush1.msra.mxu0 0.0
    %322 = vmatprep.subr.mxu0 0.0
    %323 = vmatpush1.msra.mxu0 0.0
    %324 = vmatprep.subr.mxu0 0.0
    %325 = vmatpush1.msra.mxu0 0.0
    %326 = vmatprep.subr.mxu0 0.0
    %327 = vmatpush1.msra.mxu0 0.0
    %328 = vmatprep.subr.mxu0 0.0
    %329 = vmatpush1.msra.mxu0 0.0
    %330 = vmatprep.subr.mxu0 0.0
    %331 = vmatpush1.msra.mxu0 0.0
    %332 = vmatprep.subr.mxu0 0.0
    %333 = vmatpush1.msra.mxu0 0.0
    %334 = vmatprep.subr.mxu0 0.0
    %335 = vmatpush1.msra.mxu0 0.0
    %336 = vmatprep.subr.mxu0 0.0
    %337 = vmatpush1.msra.mxu0 0.0
    %338 = vmatprep.subr.mxu0 0.0
    %339 = vmatpush1.msra.mxu0 0.0
    %340 = vmatprep.subr.mxu0 0.0
    %341 = vmatpush1.msra.mxu0 %v164
    %342 = vmatprep.subr.mxu0 0.0
    %343 = vmatpush1.msra.mxu0 %v163
    %344 = vmatprep.subr.mxu0 0.0
    %345 = vmatpush1.msra.mxu0 %v162
    %346 = vmatprep.subr.mxu0 0.0
    %347 = vmatpush1.msra.mxu0 %v161
    %348 = vmatprep.subr.mxu0 0.0
    %349 = vmatpush2.msra.mxu0 0.0
    %350 = vmatprep.subr.mxu0 0.0
    %351 = vmatpush2.msra.mxu0 0.0
    %352 = vmatprep.subr.mxu0 0.0
    %353 = vmatpush2.msra.mxu0 0.0
    %354 = vmatprep.subr.mxu0 0.0
    %355 = vmatpush2.msra.mxu0 0.0
    %356 = vmatprep.subr.mxu0 0.0
    %357 = vmatpush2.msra.mxu0 0.0
    %358 = vmatprep.subr.mxu0 0.0
    %359 = vmatpush2.msra.mxu0 0.0
    %360 = vmatprep.subr.mxu0 0.0
    %361 = vmatpush2.msra.mxu0 0.0
    %362 = vmatprep.subr.mxu0 0.0
    %363 = vmatpush2.msra.mxu0 0.0
    %364 = vmatprep.subr.mxu0 0.0
    %365 = vmatpush2.msra.mxu0 0.0
    %366 = vmatprep.subr.mxu0 0.0
    %367 = vmatpush2.msra.mxu0 0.0
    %368 = vmatprep.subr.mxu0 0.0
    %369 = vmatpush2.msra.mxu0 0.0
    %370 = vmatprep.subr.mxu0 0.0
    %371 = vmatpush2.msra.mxu0 0.0
    %372 = vmatprep.subr.mxu0 0.0
    %373 = vmatpush2.msra.mxu0 0.0
    %374 = vmatprep.subr.mxu0 0.0
    %375 = vmatpush2.msra.mxu0 0.0
    %376 = vmatprep.subr.mxu0 0.0
    %377 = vmatpush2.msra.mxu0 0.0
    %378 = vmatprep.subr.mxu0 0.0
    %379 = vmatpush2.msra.mxu0 0.0
    %380 = vmatprep.mubr.f32.mxu0 0.0
    %381 = vmatmul.mubr.f32.gmra.mxu0 %v314
    %v382 = vpop.f32.mrf.mxu0
    %v383 = vadd.f32 0.0, %v382
    %v384 = vpop.f32.mrf.mxu0
    %385 = vdwg.mxu0
    %v387 = vrot.slane %v383, 7
    %v390 = vadd.f32 %v147, %v387
    %v391 = vadd.f32 %v152, %v383
    %v392 = vxor.u32 %v390, 2147483648
    %v393 = vxor.u32 %v391, 2147483648
    %v394 = vmul.f32 %v392, 1.442695
    %v395 = vpow.pop %v394
    %v396 = vmul.f32 %v393, 1.442695
    %v397 = vpow.pop %v396
    %v398 = vadd.f32 %v395, 1.0
    %v399 = vadd.f32 %v397, 1.0
    %v400 = vrcp.pop %v398
    %v401 = vmul.f32 1.0, %v400
    %v402 = vrcp.pop %v399
    %v403 = vmul.f32 1.0, %v402
    %v404 = vadd.f32 %v383, %v259
    %v406 = vrot.slane %v404, 7
    %407 = vrot.lane.b32.xlu0 %v406, 64
    %v408 = vpop.permute.xlu0 %407
    %409 = vrot.lane.b32.xlu0 %v404, 64
    %v410 = vpop.permute.xlu0 %409
    %v413 = vmul.f32 %v401, %v408
    %v414 = vmul.f32 %v403, %v410
    %417 = vrot.lane.b32.xlu0 %v413, 64
    %v418 = vpop.permute.xlu0 %417
    %419 = vrot.lane.b32.xlu0 %v414, 64
    %v420 = vpop.permute.xlu0 %419
    %v423 = vadd.f32 %v147, %v418
    %v424 = vadd.f32 %v152, %v420
    %v425 = vtanh.pop %v423
    %v426 = vtanh.pop %v424
    %v427 = vsub.f32 1.0, %v401
    %v428 = vsub.f32 1.0, %v403
    %431 = vrot.lane.b32.xlu0 %v425, 96
    %v432 = vpop.permute.xlu0 %431
    %433 = vrot.lane.b32.xlu0 %v426, 96
    %v434 = vpop.permute.xlu0 %433
    %v437 = vmul.f32 %v427, %v432
    %v438 = vmul.f32 %v428, %v434
    %v439 = vrot.slane %v305, 7
    %v442 = vmul.f32 %v401, %v439
    %v443 = vmul.f32 %v403, %v309
    %v444 = vadd.f32 %v437, %v442
    %v445 = vadd.f32 %v438, %v443
    %v448 = vrot.slane %v444, 1
    %v449 = vsel %vm310, %v445, %v448
    %450 = vrot.lane.b32.xlu0 %v449, 96
    %v451 = vpop.permute.xlu0 %450
    %v452 = vsel %vm166, %v451, 0
    %454 = vmatprep.subr.mxu0 0.0
    %455 = vmatpush1.msra.mxu0 0.0
    %456 = vmatprep.subr.mxu0 0.0
    %457 = vmatpush1.msra.mxu0 0.0
    %458 = vmatprep.subr.mxu0 0.0
    %459 = vmatpush1.msra.mxu0 0.0
    %460 = vmatprep.subr.mxu0 0.0
    %461 = vmatpush1.msra.mxu0 0.0
    %462 = vmatprep.subr.mxu0 0.0
    %463 = vmatpush1.msra.mxu0 0.0
    %464 = vmatprep.subr.mxu0 0.0
    %465 = vmatpush1.msra.mxu0 0.0
    %466 = vmatprep.subr.mxu0 0.0
    %467 = vmatpush1.msra.mxu0 0.0
    %468 = vmatprep.subr.mxu0 0.0
    %469 = vmatpush1.msra.mxu0 0.0
    %470 = vmatprep.subr.mxu0 0.0
    %471 = vmatpush1.msra.mxu0 0.0
    %472 = vmatprep.subr.mxu0 0.0
    %473 = vmatpush1.msra.mxu0 0.0
    %474 = vmatprep.subr.mxu0 0.0
    %475 = vmatpush1.msra.mxu0 0.0
    %476 = vmatprep.subr.mxu0 0.0
    %477 = vmatpush1.msra.mxu0 0.0
    %478 = vmatprep.subr.mxu0 0.0
    %479 = vmatpush1.msra.mxu0 %v164
    %480 = vmatprep.subr.mxu0 0.0
    %481 = vmatpush1.msra.mxu0 %v163
    %482 = vmatprep.subr.mxu0 0.0
    %483 = vmatpush1.msra.mxu0 %v162
    %484 = vmatprep.subr.mxu0 0.0
    %485 = vmatpush1.msra.mxu0 %v161
    %486 = vmatprep.subr.mxu0 0.0
    %487 = vmatpush2.msra.mxu0 0.0
    %488 = vmatprep.subr.mxu0 0.0
    %489 = vmatpush2.msra.mxu0 0.0
    %490 = vmatprep.subr.mxu0 0.0
    %491 = vmatpush2.msra.mxu0 0.0
    %492 = vmatprep.subr.mxu0 0.0
    %493 = vmatpush2.msra.mxu0 0.0
    %494 = vmatprep.subr.mxu0 0.0
    %495 = vmatpush2.msra.mxu0 0.0
    %496 = vmatprep.subr.mxu0 0.0
    %497 = vmatpush2.msra.mxu0 0.0
    %498 = vmatprep.subr.mxu0 0.0
    %499 = vmatpush2.msra.mxu0 0.0
    %500 = vmatprep.subr.mxu0 0.0
    %501 = vmatpush2.msra.mxu0 0.0
    %502 = vmatprep.subr.mxu0 0.0
    %503 = vmatpush2.msra.mxu0 0.0
    %504 = vmatprep.subr.mxu0 0.0
    %505 = vmatpush2.msra.mxu0 0.0
    %506 = vmatprep.subr.mxu0 0.0
    %507 = vmatpush2.msra.mxu0 0.0
    %508 = vmatprep.subr.mxu0 0.0
    %509 = vmatpush2.msra.mxu0 0.0
    %510 = vmatprep.subr.mxu0 0.0
    %511 = vmatpush2.msra.mxu0 0.0
    %512 = vmatprep.subr.mxu0 0.0
    %513 = vmatpush2.msra.mxu0 0.0
    %514 = vmatprep.subr.mxu0 0.0
    %515 = vmatpush2.msra.mxu0 0.0
    %516 = vmatprep.subr.mxu0 0.0
    %517 = vmatpush2.msra.mxu0 0.0
    %518 = vmatprep.mubr.f32.mxu0 0.0
    %519 = vmatmul.mubr.f32.gmra.mxu0 %v452
    %v520 = vpop.f32.mrf.mxu0
    %v521 = vadd.f32 0.0, %v520
    %v522 = vpop.f32.mrf.mxu0
    %523 = vdwg.mxu0
    %v525 = vrot.slane %v521, 6
    %v526 = vrot.slane %v521, 7
    %v529 = vadd.f32 %v147, %v525
    %v530 = vadd.f32 %v152, %v526
    %v531 = vxor.u32 %v529, 2147483648
    %v532 = vxor.u32 %v530, 2147483648
    %v533 = vmul.f32 %v531, 1.442695
    %v534 = vpow.pop %v533
    %v535 = vmul.f32 %v532, 1.442695
    %v536 = vpow.pop %v535
    %v537 = vadd.f32 %v534, 1.0
    %v538 = vadd.f32 %v536, 1.0
    %v539 = vrcp.pop %v537
    %v540 = vmul.f32 1.0, %v539
    %v541 = vrcp.pop %v538
    %v542 = vmul.f32 1.0, %v541
    %v543 = vadd.f32 %v521, %v259
    %v545 = vrot.slane %v543, 6
    %v546 = vrot.slane %v543, 7
    %547 = vrot.lane.b32.xlu0 %v545, 64
    %v548 = vpop.permute.xlu0 %547
    %549 = vrot.lane.b32.xlu0 %v546, 64
    %v550 = vpop.permute.xlu0 %549
    %v553 = vmul.f32 %v540, %v548
    %v554 = vmul.f32 %v542, %v550
    %557 = vrot.lane.b32.xlu0 %v553, 64
    %v558 = vpop.permute.xlu0 %557
    %559 = vrot.lane.b32.xlu0 %v554, 64
    %v560 = vpop.permute.xlu0 %559
    %v563 = vadd.f32 %v147, %v558
    %v564 = vadd.f32 %v152, %v560
    %v565 = vtanh.pop %v563
    %v566 = vtanh.pop %v564
    %v567 = vsub.f32 1.0, %v540
    %v568 = vsub.f32 1.0, %v542
    %571 = vrot.lane.b32.xlu0 %v565, 96
    %v572 = vpop.permute.xlu0 %571
    %573 = vrot.lane.b32.xlu0 %v566, 96
    %v574 = vpop.permute.xlu0 %573
    %v577 = vmul.f32 %v567, %v572
    %v578 = vmul.f32 %v568, %v574
    %v579 = vrot.slane %v444, 7
    %v580 = vrot.slane %v445, 7
    %v583 = vmul.f32 %v540, %v579
    %v584 = vmul.f32 %v542, %v580
    %v585 = vadd.f32 %v577, %v583
    %v586 = vadd.f32 %v578, %v584
    %v589 = vrot.slane %v585, 2
    %v590 = vrot.slane %v586, 1
    %v591 = vsel %vm310, %v590, %v589
    %592 = vrot.lane.b32.xlu0 %v591, 96
    %v593 = vpop.permute.xlu0 %592
    %v594 = vsel %vm166, %v593, 0
    %596 = vmatprep.subr.mxu0 0.0
    %597 = vmatpush1.msra.mxu0 0.0
    %598 = vmatprep.subr.mxu0 0.0
    %599 = vmatpush1.msra.mxu0 0.0
    %600 = vmatprep.subr.mxu0 0.0
    %601 = vmatpush1.msra.mxu0 0.0
    %602 = vmatprep.subr.mxu0 0.0
    %603 = vmatpush1.msra.mxu0 0.0
    %604 = vmatprep.subr.mxu0 0.0
    %605 = vmatpush1.msra.mxu0 0.0
    %606 = vmatprep.subr.mxu0 0.0
    %607 = vmatpush1.msra.mxu0 0.0
    %608 = vmatprep.subr.mxu0 0.0
    %609 = vmatpush1.msra.mxu0 0.0
    %610 = vmatprep.subr.mxu0 0.0
    %611 = vmatpush1.msra.mxu0 0.0
    %612 = vmatprep.subr.mxu0 0.0
    %613 = vmatpush1.msra.mxu0 0.0
    %614 = vmatprep.subr.mxu0 0.0
    %615 = vmatpush1.msra.mxu0 0.0
    %616 = vmatprep.subr.mxu0 0.0
    %617 = vmatpush1.msra.mxu0 0.0
    %618 = vmatprep.subr.mxu0 0.0
    %619 = vmatpush1.msra.mxu0 0.0
    %620 = vmatprep.subr.mxu0 0.0
    %621 = vmatpush1.msra.mxu0 %v164
    %622 = vmatprep.subr.mxu0 0.0
    %623 = vmatpush1.msra.mxu0 %v163
    %624 = vmatprep.subr.mxu0 0.0
    %625 = vmatpush1.msra.mxu0 %v162
    %626 = vmatprep.subr.mxu0 0.0
    %627 = vmatpush1.msra.mxu0 %v161
    %628 = vmatprep.subr.mxu0 0.0
    %629 = vmatpush2.msra.mxu0 0.0
    %630 = vmatprep.subr.mxu0 0.0
    %631 = vmatpush2.msra.mxu0 0.0
    %632 = vmatprep.subr.mxu0 0.0
    %633 = vmatpush2.msra.mxu0 0.0
    %634 = vmatprep.subr.mxu0 0.0
    %635 = vmatpush2.msra.mxu0 0.0
    %636 = vmatprep.subr.mxu0 0.0
    %637 = vmatpush2.msra.mxu0 0.0
    %638 = vmatprep.subr.mxu0 0.0
    %639 = vmatpush2.msra.mxu0 0.0
    %640 = vmatprep.subr.mxu0 0.0
    %641 = vmatpush2.msra.mxu0 0.0
    %642 = vmatprep.subr.mxu0 0.0
    %643 = vmatpush2.msra.mxu0 0.0
    %644 = vmatprep.subr.mxu0 0.0
    %645 = vmatpush2.msra.mxu0 0.0
    %646 = vmatprep.subr.mxu0 0.0
    %647 = vmatpush2.msra.mxu0 0.0
    %648 = vmatprep.subr.mxu0 0.0
    %649 = vmatpush2.msra.mxu0 0.0
    %650 = vmatprep.subr.mxu0 0.0
    %651 = vmatpush2.msra.mxu0 0.0
    %652 = vmatprep.subr.mxu0 0.0
    %653 = vmatpush2.msra.mxu0 0.0
    %654 = vmatprep.subr.mxu0 0.0
    %655 = vmatpush2.msra.mxu0 0.0
    %656 = vmatprep.subr.mxu0 0.0
    %657 = vmatpush2.msra.mxu0 0.0
    %658 = vmatprep.subr.mxu0 0.0
    %659 = vmatpush2.msra.mxu0 0.0
    %660 = vmatprep.mubr.f32.mxu0 0.0
    %661 = vmatmul.mubr.f32.gmra.mxu0 %v594
    %v662 = vpop.f32.mrf.mxu0
    %v663 = vadd.f32 0.0, %v662
    %v664 = vpop.f32.mrf.mxu0
    %665 = vdwg.mxu0
    %v667 = vrot.slane %v663, 5
    %v668 = vrot.slane %v663, 6
    %v671 = vadd.f32 %v147, %v667
    %v672 = vadd.f32 %v152, %v668
    %v673 = vxor.u32 %v671, 2147483648
    %v674 = vxor.u32 %v672, 2147483648
    %v675 = vmul.f32 %v673, 1.442695
    %v676 = vpow.pop %v675
    %v677 = vmul.f32 %v674, 1.442695
    %v678 = vpow.pop %v677
    %v679 = vadd.f32 %v676, 1.0
    %v680 = vadd.f32 %v678, 1.0
    %v681 = vrcp.pop %v679
    %v682 = vmul.f32 1.0, %v681
    %v683 = vrcp.pop %v680
    %v684 = vmul.f32 1.0, %v683
    %v685 = vadd.f32 %v663, %v259
    %v687 = vrot.slane %v685, 5
    %v688 = vrot.slane %v685, 6
    %689 = vrot.lane.b32.xlu0 %v687, 64
    %v690 = vpop.permute.xlu0 %689
    %691 = vrot.lane.b32.xlu0 %v688, 64
    %v692 = vpop.permute.xlu0 %691
    %v695 = vmul.f32 %v682, %v690
    %v696 = vmul.f32 %v684, %v692
    %699 = vrot.lane.b32.xlu0 %v695, 64
    %v700 = vpop.permute.xlu0 %699
    %701 = vrot.lane.b32.xlu0 %v696, 64
    %v702 = vpop.permute.xlu0 %701
    %v705 = vadd.f32 %v147, %v700
    %v706 = vadd.f32 %v152, %v702
    %v707 = vtanh.pop %v705
    %v708 = vtanh.pop %v706
    %v709 = vsub.f32 1.0, %v682
    %v710 = vsub.f32 1.0, %v684
    %713 = vrot.lane.b32.xlu0 %v707, 96
    %v714 = vpop.permute.xlu0 %713
    %715 = vrot.lane.b32.xlu0 %v708, 96
    %v716 = vpop.permute.xlu0 %715
    %v719 = vmul.f32 %v709, %v714
    %v720 = vmul.f32 %v710, %v716
    %v721 = vrot.slane %v585, 7
    %v722 = vrot.slane %v586, 7
    %v725 = vmul.f32 %v682, %v721
    %v726 = vmul.f32 %v684, %v722
    %v727 = vadd.f32 %v719, %v725
    %v728 = vadd.f32 %v720, %v726
    %v731 = vrot.slane %v727, 3
    %v732 = vrot.slane %v728, 2
    %v733 = vsel %vm310, %v732, %v731
    %734 = vrot.lane.b32.xlu0 %v733, 96
    %v735 = vpop.permute.xlu0 %734
    %v736 = vsel %vm166, %v735, 0
    %738 = vmatprep.subr.mxu0 0.0
    %739 = vmatpush1.msra.mxu0 0.0
    %740 = vmatprep.subr.mxu0 0.0
    %741 = vmatpush1.msra.mxu0 0.0
    %742 = vmatprep.subr.mxu0 0.0
    %743 = vmatpush1.msra.mxu0 0.0
    %744 = vmatprep.subr.mxu0 0.0
    %745 = vmatpush1.msra.mxu0 0.0
    %746 = vmatprep.subr.mxu0 0.0
    %747 = vmatpush1.msra.mxu0 0.0
    %748 = vmatprep.subr.mxu0 0.0
    %749 = vmatpush1.msra.mxu0 0.0
    %750 = vmatprep.subr.mxu0 0.0
    %751 = vmatpush1.msra.mxu0 0.0
    %752 = vmatprep.subr.mxu0 0.0
    %753 = vmatpush1.msra.mxu0 0.0
    %754 = vmatprep.subr.mxu0 0.0
    %755 = vmatpush1.msra.mxu0 0.0
    %756 = vmatprep.subr.mxu0 0.0
    %757 = vmatpush1.msra.mxu0 0.0
    %758 = vmatprep.subr.mxu0 0.0
    %759 = vmatpush1.msra.mxu0 0.0
    %760 = vmatprep.subr.mxu0 0.0
    %761 = vmatpush1.msra.mxu0 0.0
    %762 = vmatprep.subr.mxu0 0.0
    %763 = vmatpush1.msra.mxu0 %v164
    %764 = vmatprep.subr.mxu0 0.0
    %765 = vmatpush1.msra.mxu0 %v163
    %766 = vmatprep.subr.mxu0 0.0
    %767 = vmatpush1.msra.mxu0 %v162
    %768 = vmatprep.subr.mxu0 0.0
    %769 = vmatpush1.msra.mxu0 %v161
    %770 = vmatprep.subr.mxu0 0.0
    %771 = vmatpush2.msra.mxu0 0.0
    %772 = vmatprep.subr.mxu0 0.0
    %773 = vmatpush2.msra.mxu0 0.0
    %774 = vmatprep.subr.mxu0 0.0
    %775 = vmatpush2.msra.mxu0 0.0
    %776 = vmatprep.subr.mxu0 0.0
    %777 = vmatpush2.msra.mxu0 0.0
    %778 = vmatprep.subr.mxu0 0.0
    %779 = vmatpush2.msra.mxu0 0.0
    %780 = vmatprep.subr.mxu0 0.0
    %781 = vmatpush2.msra.mxu0 0.0
    %782 = vmatprep.subr.mxu0 0.0
    %783 = vmatpush2.msra.mxu0 0.0
    %784 = vmatprep.subr.mxu0 0.0
    %785 = vmatpush2.msra.mxu0 0.0
    %786 = vmatprep.subr.mxu0 0.0
    %787 = vmatpush2.msra.mxu0 0.0
    %788 = vmatprep.subr.mxu0 0.0
    %789 = vmatpush2.msra.mxu0 0.0
    %790 = vmatprep.subr.mxu0 0.0
    %791 = vmatpush2.msra.mxu0 0.0
    %792 = vmatprep.subr.mxu0 0.0
    %793 = vmatpush2.msra.mxu0 0.0
    %794 = vmatprep.subr.mxu0 0.0
    %795 = vmatpush2.msra.mxu0 0.0
    %796 = vmatprep.subr.mxu0 0.0
    %797 = vmatpush2.msra.mxu0 0.0
    %798 = vmatprep.subr.mxu0 0.0
    %799 = vmatpush2.msra.mxu0 0.0
    %800 = vmatprep.subr.mxu0 0.0
    %801 = vmatpush2.msra.mxu0 0.0
    %802 = vmatprep.mubr.f32.mxu0 0.0
    %803 = vmatmul.mubr.f32.gmra.mxu0 %v736
    %v804 = vpop.f32.mrf.mxu0
    %v805 = vadd.f32 0.0, %v804
    %v806 = vpop.f32.mrf.mxu0
    %807 = vdwg.mxu0
    %v809 = vrot.slane %v805, 4
    %v810 = vrot.slane %v805, 5
    %v813 = vadd.f32 %v147, %v809
    %v814 = vadd.f32 %v152, %v810
    %v815 = vxor.u32 %v813, 2147483648
    %v816 = vxor.u32 %v814, 2147483648
    %v817 = vmul.f32 %v815, 1.442695
    %v818 = vpow.pop %v817
    %v819 = vmul.f32 %v816, 1.442695
    %v820 = vpow.pop %v819
    %v821 = vadd.f32 %v818, 1.0
    %v822 = vadd.f32 %v820, 1.0
    %v823 = vrcp.pop %v821
    %v824 = vmul.f32 1.0, %v823
    %v825 = vrcp.pop %v822
    %v826 = vmul.f32 1.0, %v825
    %v827 = vadd.f32 %v805, %v259
    %v829 = vrot.slane %v827, 4
    %v830 = vrot.slane %v827, 5
    %831 = vrot.lane.b32.xlu0 %v829, 64
    %v832 = vpop.permute.xlu0 %831
    %833 = vrot.lane.b32.xlu0 %v830, 64
    %v834 = vpop.permute.xlu0 %833
    %v837 = vmul.f32 %v824, %v832
    %v838 = vmul.f32 %v826, %v834
    %841 = vrot.lane.b32.xlu0 %v837, 64
    %v842 = vpop.permute.xlu0 %841
    %843 = vrot.lane.b32.xlu0 %v838, 64
    %v844 = vpop.permute.xlu0 %843
    %v847 = vadd.f32 %v147, %v842
    %v848 = vadd.f32 %v152, %v844
    %v849 = vtanh.pop %v847
    %v850 = vtanh.pop %v848
    %v851 = vsub.f32 1.0, %v824
    %v852 = vsub.f32 1.0, %v826
    %855 = vrot.lane.b32.xlu0 %v849, 96
    %v856 = vpop.permute.xlu0 %855
    %857 = vrot.lane.b32.xlu0 %v850, 96
    %v858 = vpop.permute.xlu0 %857
    %v861 = vmul.f32 %v851, %v856
    %v862 = vmul.f32 %v852, %v858
    %v863 = vrot.slane %v727, 7
    %v864 = vrot.slane %v728, 7
    %v867 = vmul.f32 %v824, %v863
    %v868 = vmul.f32 %v826, %v864
    %v869 = vadd.f32 %v861, %v867
    %v870 = vadd.f32 %v862, %v868
    %v873 = vrot.slane %v869, 4
    %v874 = vrot.slane %v870, 3
    %v875 = vsel %vm310, %v874, %v873
    %876 = vrot.lane.b32.xlu0 %v875, 96
    %v877 = vpop.permute.xlu0 %876
    %v878 = vsel %vm166, %v877, 0
    %880 = vmatprep.subr.mxu0 0.0
    %881 = vmatpush1.msra.mxu0 0.0
    %882 = vmatprep.subr.mxu0 0.0
    %883 = vmatpush1.msra.mxu0 0.0
    %884 = vmatprep.subr.mxu0 0.0
    %885 = vmatpush1.msra.mxu0 0.0
    %886 = vmatprep.subr.mxu0 0.0
    %887 = vmatpush1.msra.mxu0 0.0
    %888 = vmatprep.subr.mxu0 0.0
    %889 = vmatpush1.msra.mxu0 0.0
    %890 = vmatprep.subr.mxu0 0.0
    %891 = vmatpush1.msra.mxu0 0.0
    %892 = vmatprep.subr.mxu0 0.0
    %893 = vmatpush1.msra.mxu0 0.0
    %894 = vmatprep.subr.mxu0 0.0
    %895 = vmatpush1.msra.mxu0 0.0
    %896 = vmatprep.subr.mxu0 0.0
    %897 = vmatpush1.msra.mxu0 0.0
    %898 = vmatprep.subr.mxu0 0.0
    %899 = vmatpush1.msra.mxu0 0.0
    %900 = vmatprep.subr.mxu0 0.0
    %901 = vmatpush1.msra.mxu0 0.0
    %902 = vmatprep.subr.mxu0 0.0
    %903 = vmatpush1.msra.mxu0 0.0
    %904 = vmatprep.subr.mxu0 0.0
    %905 = vmatpush1.msra.mxu0 %v164
    %906 = vmatprep.subr.mxu0 0.0
    %907 = vmatpush1.msra.mxu0 %v163
    %908 = vmatprep.subr.mxu0 0.0
    %909 = vmatpush1.msra.mxu0 %v162
    %910 = vmatprep.subr.mxu0 0.0
    %911 = vmatpush1.msra.mxu0 %v161
    %912 = vmatprep.subr.mxu0 0.0
    %913 = vmatpush2.msra.mxu0 0.0
    %914 = vmatprep.subr.mxu0 0.0
    %915 = vmatpush2.msra.mxu0 0.0
    %916 = vmatprep.subr.mxu0 0.0
    %917 = vmatpush2.msra.mxu0 0.0
    %918 = vmatprep.subr.mxu0 0.0
    %919 = vmatpush2.msra.mxu0 0.0
    %920 = vmatprep.subr.mxu0 0.0
    %921 = vmatpush2.msra.mxu0 0.0
    %922 = vmatprep.subr.mxu0 0.0
    %923 = vmatpush2.msra.mxu0 0.0
    %924 = vmatprep.subr.mxu0 0.0
    %925 = vmatpush2.msra.mxu0 0.0
    %926 = vmatprep.subr.mxu0 0.0
    %927 = vmatpush2.msra.mxu0 0.0
    %928 = vmatprep.subr.mxu0 0.0
    %929 = vmatpush2.msra.mxu0 0.0
    %930 = vmatprep.subr.mxu0 0.0
    %931 = vmatpush2.msra.mxu0 0.0
    %932 = vmatprep.subr.mxu0 0.0
    %933 = vmatpush2.msra.mxu0 0.0
    %934 = vmatprep.subr.mxu0 0.0
    %935 = vmatpush2.msra.mxu0 0.0
    %936 = vmatprep.subr.mxu0 0.0
    %937 = vmatpush2.msra.mxu0 0.0
    %938 = vmatprep.subr.mxu0 0.0
    %939 = vmatpush2.msra.mxu0 0.0
    %940 = vmatprep.subr.mxu0 0.0
    %941 = vmatpush2.msra.mxu0 0.0
    %942 = vmatprep.subr.mxu0 0.0
    %943 = vmatpush2.msra.mxu0 0.0
    %944 = vmatprep.mubr.f32.mxu0 0.0
    %945 = vmatmul.mubr.f32.gmra.mxu0 %v878
    %v946 = vpop.f32.mrf.mxu0
    %v947 = vadd.f32 0.0, %v946
    %v948 = vpop.f32.mrf.mxu0
    %949 = vdwg.mxu0
    %v951 = vrot.slane %v947, 3
    %v952 = vrot.slane %v947, 4
    %v955 = vadd.f32 %v147, %v951
    %v956 = vadd.f32 %v152, %v952
    %v957 = vxor.u32 %v955, 2147483648
    %v958 = vxor.u32 %v956, 2147483648
    %v959 = vmul.f32 %v957, 1.442695
    %v960 = vpow.pop %v959
    %v961 = vmul.f32 %v958, 1.442695
    %v962 = vpow.pop %v961
    %v963 = vadd.f32 %v960, 1.0
    %v964 = vadd.f32 %v962, 1.0
    %v965 = vrcp.pop %v963
    %v966 = vmul.f32 1.0, %v965
    %v967 = vrcp.pop %v964
    %v968 = vmul.f32 1.0, %v967
    %v969 = vadd.f32 %v947, %v259
    %v971 = vrot.slane %v969, 3
    %v972 = vrot.slane %v969, 4
    %973 = vrot.lane.b32.xlu0 %v971, 64
    %v974 = vpop.permute.xlu0 %973
    %975 = vrot.lane.b32.xlu0 %v972, 64
    %v976 = vpop.permute.xlu0 %975
    %v979 = vmul.f32 %v966, %v974
    %v980 = vmul.f32 %v968, %v976
    %983 = vrot.lane.b32.xlu0 %v979, 64
    %v984 = vpop.permute.xlu0 %983
    %985 = vrot.lane.b32.xlu0 %v980, 64
    %v986 = vpop.permute.xlu0 %985
    %v989 = vadd.f32 %v147, %v984
    %v990 = vadd.f32 %v152, %v986
    %v991 = vtanh.pop %v989
    %v992 = vtanh.pop %v990
    %v993 = vsub.f32 1.0, %v966
    %v994 = vsub.f32 1.0, %v968
    %997 = vrot.lane.b32.xlu0 %v991, 96
    %v998 = vpop.permute.xlu0 %997
    %999 = vrot.lane.b32.xlu0 %v992, 96
    %v1000 = vpop.permute.xlu0 %999
    %v1003 = vmul.f32 %v993, %v998
    %v1004 = vmul.f32 %v994, %v1000
    %v1005 = vrot.slane %v869, 7
    %v1006 = vrot.slane %v870, 7
    %v1009 = vmul.f32 %v966, %v1005
    %v1010 = vmul.f32 %v968, %v1006
    %v1011 = vadd.f32 %v1003, %v1009
    %v1012 = vadd.f32 %v1004, %v1010
    %v1015 = vrot.slane %v1011, 5
    %v1016 = vrot.slane %v1012, 4
    %v1017 = vsel %vm310, %v1016, %v1015
    %1018 = vrot.lane.b32.xlu0 %v1017, 96
    %v1019 = vpop.permute.xlu0 %1018
    %v1020 = vsel %vm166, %v1019, 0
    %1022 = vmatprep.subr.mxu0 0.0
    %1023 = vmatpush1.msra.mxu0 0.0
    %1024 = vmatprep.subr.mxu0 0.0
    %1025 = vmatpush1.msra.mxu0 0.0
    %1026 = vmatprep.subr.mxu0 0.0
    %1027 = vmatpush1.msra.mxu0 0.0
    %1028 = vmatprep.subr.mxu0 0.0
    %1029 = vmatpush1.msra.mxu0 0.0
    %1030 = vmatprep.subr.mxu0 0.0
    %1031 = vmatpush1.msra.mxu0 0.0
    %1032 = vmatprep.subr.mxu0 0.0
    %1033 = vmatpush1.msra.mxu0 0.0
    %1034 = vmatprep.subr.mxu0 0.0
    %1035 = vmatpush1.msra.mxu0 0.0
    %1036 = vmatprep.subr.mxu0 0.0
    %1037 = vmatpush1.msra.mxu0 0.0
    %1038 = vmatprep.subr.mxu0 0.0
    %1039 = vmatpush1.msra.mxu0 0.0
    %1040 = vmatprep.subr.mxu0 0.0
    %1041 = vmatpush1.msra.mxu0 0.0
    %1042 = vmatprep.subr.mxu0 0.0
    %1043 = vmatpush1.msra.mxu0 0.0
    %1044 = vmatprep.subr.mxu0 0.0
    %1045 = vmatpush1.msra.mxu0 0.0
    %1046 = vmatprep.subr.mxu0 0.0
    %1047 = vmatpush1.msra.mxu0 %v164
    %1048 = vmatprep.subr.mxu0 0.0
    %1049 = vmatpush1.msra.mxu0 %v163
    %1050 = vmatprep.subr.mxu0 0.0
    %1051 = vmatpush1.msra.mxu0 %v162
    %1052 = vmatprep.subr.mxu0 0.0
    %1053 = vmatpush1.msra.mxu0 %v161
    %1054 = vmatprep.subr.mxu0 0.0
    %1055 = vmatpush2.msra.mxu0 0.0
    %1056 = vmatprep.subr.mxu0 0.0
    %1057 = vmatpush2.msra.mxu0 0.0
    %1058 = vmatprep.subr.mxu0 0.0
    %1059 = vmatpush2.msra.mxu0 0.0
    %1060 = vmatprep.subr.mxu0 0.0
    %1061 = vmatpush2.msra.mxu0 0.0
    %1062 = vmatprep.subr.mxu0 0.0
    %1063 = vmatpush2.msra.mxu0 0.0
    %1064 = vmatprep.subr.mxu0 0.0
    %1065 = vmatpush2.msra.mxu0 0.0
    %1066 = vmatprep.subr.mxu0 0.0
    %1067 = vmatpush2.msra.mxu0 0.0
    %1068 = vmatprep.subr.mxu0 0.0
    %1069 = vmatpush2.msra.mxu0 0.0
    %1070 = vmatprep.subr.mxu0 0.0
    %1071 = vmatpush2.msra.mxu0 0.0
    %1072 = vmatprep.subr.mxu0 0.0
    %1073 = vmatpush2.msra.mxu0 0.0
    %1074 = vmatprep.subr.mxu0 0.0
    %1075 = vmatpush2.msra.mxu0 0.0
    %1076 = vmatprep.subr.mxu0 0.0
    %1077 = vmatpush2.msra.mxu0 0.0
    %1078 = vmatprep.subr.mxu0 0.0
    %1079 = vmatpush2.msra.mxu0 0.0
    %1080 = vmatprep.subr.mxu0 0.0
    %1081 = vmatpush2.msra.mxu0 0.0
    %1082 = vmatprep.subr.mxu0 0.0
    %1083 = vmatpush2.msra.mxu0 0.0
    %1084 = vmatprep.subr.mxu0 0.0
    %1085 = vmatpush2.msra.mxu0 0.0
    %1086 = vmatprep.mubr.f32.mxu0 0.0
    %1087 = vmatmul.mubr.f32.gmra.mxu0 %v1020
    %v1088 = vpop.f32.mrf.mxu0
    %v1089 = vadd.f32 0.0, %v1088
    %v1090 = vpop.f32.mrf.mxu0
    %1091 = vdwg.mxu0
    %v1093 = vrot.slane %v1089, 2
    %v1094 = vrot.slane %v1089, 3
    %v1097 = vadd.f32 %v147, %v1093
    %v1098 = vadd.f32 %v152, %v1094
    %v1099 = vxor.u32 %v1097, 2147483648
    %v1100 = vxor.u32 %v1098, 2147483648
    %v1101 = vmul.f32 %v1099, 1.442695
    %v1102 = vpow.pop %v1101
    %v1103 = vmul.f32 %v1100, 1.442695
    %v1104 = vpow.pop %v1103
    %v1105 = vadd.f32 %v1102, 1.0
    %v1106 = vadd.f32 %v1104, 1.0
    %v1107 = vrcp.pop %v1105
    %v1108 = vmul.f32 1.0, %v1107
    %v1109 = vrcp.pop %v1106
    %v1110 = vmul.f32 1.0, %v1109
    %v1111 = vadd.f32 %v1089, %v259
    %v1113 = vrot.slane %v1111, 2
    %v1114 = vrot.slane %v1111, 3
    %1115 = vrot.lane.b32.xlu0 %v1113, 64
    %v1116 = vpop.permute.xlu0 %1115
    %1117 = vrot.lane.b32.xlu0 %v1114, 64
    %v1118 = vpop.permute.xlu0 %1117
    %v1121 = vmul.f32 %v1108, %v1116
    %v1122 = vmul.f32 %v1110, %v1118
    %1125 = vrot.lane.b32.xlu0 %v1121, 64
    %v1126 = vpop.permute.xlu0 %1125
    %1127 = vrot.lane.b32.xlu0 %v1122, 64
    %v1128 = vpop.permute.xlu0 %1127
    %v1131 = vadd.f32 %v147, %v1126
    %v1132 = vadd.f32 %v152, %v1128
    %v1133 = vtanh.pop %v1131
    %v1134 = vtanh.pop %v1132
    %v1135 = vsub.f32 1.0, %v1108
    %v1136 = vsub.f32 1.0, %v1110
    %1139 = vrot.lane.b32.xlu0 %v1133, 96
    %v1140 = vpop.permute.xlu0 %1139
    %1141 = vrot.lane.b32.xlu0 %v1134, 96
    %v1142 = vpop.permute.xlu0 %1141
    %v1145 = vmul.f32 %v1135, %v1140
    %v1146 = vmul.f32 %v1136, %v1142
    %v1147 = vrot.slane %v1011, 7
    %v1148 = vrot.slane %v1012, 7
    %v1151 = vmul.f32 %v1108, %v1147
    %v1152 = vmul.f32 %v1110, %v1148
    %v1153 = vadd.f32 %v1145, %v1151
    %v1154 = vadd.f32 %v1146, %v1152
    %v1157 = vrot.slane %v1153, 6
    %v1158 = vrot.slane %v1154, 5
    %v1159 = vsel %vm310, %v1158, %v1157
    %1160 = vrot.lane.b32.xlu0 %v1159, 96
    %v1161 = vpop.permute.xlu0 %1160
    %v1162 = vsel %vm166, %v1161, 0
    %1164 = vmatprep.subr.mxu0 0.0
    %1165 = vmatpush1.msra.mxu0 0.0
    %1166 = vmatprep.subr.mxu0 0.0
    %1167 = vmatpush1.msra.mxu0 0.0
    %1168 = vmatprep.subr.mxu0 0.0
    %1169 = vmatpush1.msra.mxu0 0.0
    %1170 = vmatprep.subr.mxu0 0.0
    %1171 = vmatpush1.msra.mxu0 0.0
    %1172 = vmatprep.subr.mxu0 0.0
    %1173 = vmatpush1.msra.mxu0 0.0
    %1174 = vmatprep.subr.mxu0 0.0
    %1175 = vmatpush1.msra.mxu0 0.0
    %1176 = vmatprep.subr.mxu0 0.0
    %1177 = vmatpush1.msra.mxu0 0.0
    %1178 = vmatprep.subr.mxu0 0.0
    %1179 = vmatpush1.msra.mxu0 0.0
    %1180 = vmatprep.subr.mxu0 0.0
    %1181 = vmatpush1.msra.mxu0 0.0
    %1182 = vmatprep.subr.mxu0 0.0
    %1183 = vmatpush1.msra.mxu0 0.0
    %1184 = vmatprep.subr.mxu0 0.0
    %1185 = vmatpush1.msra.mxu0 0.0
    %1186 = vmatprep.subr.mxu0 0.0
    %1187 = vmatpush1.msra.mxu0 0.0
    %1188 = vmatprep.subr.mxu0 0.0
    %1189 = vmatpush1.msra.mxu0 %v164
    %1190 = vmatprep.subr.mxu0 0.0
    %1191 = vmatpush1.msra.mxu0 %v163
    %1192 = vmatprep.subr.mxu0 0.0
    %1193 = vmatpush1.msra.mxu0 %v162
    %1194 = vmatprep.subr.mxu0 0.0
    %1195 = vmatpush1.msra.mxu0 %v161
    %1196 = vmatprep.subr.mxu0 0.0
    %1197 = vmatpush2.msra.mxu0 0.0
    %1198 = vmatprep.subr.mxu0 0.0
    %1199 = vmatpush2.msra.mxu0 0.0
    %1200 = vmatprep.subr.mxu0 0.0
    %1201 = vmatpush2.msra.mxu0 0.0
    %1202 = vmatprep.subr.mxu0 0.0
    %1203 = vmatpush2.msra.mxu0 0.0
    %1204 = vmatprep.subr.mxu0 0.0
    %1205 = vmatpush2.msra.mxu0 0.0
    %1206 = vmatprep.subr.mxu0 0.0
    %1207 = vmatpush2.msra.mxu0 0.0
    %1208 = vmatprep.subr.mxu0 0.0
    %1209 = vmatpush2.msra.mxu0 0.0
    %1210 = vmatprep.subr.mxu0 0.0
    %1211 = vmatpush2.msra.mxu0 0.0
    %1212 = vmatprep.subr.mxu0 0.0
    %1213 = vmatpush2.msra.mxu0 0.0
    %1214 = vmatprep.subr.mxu0 0.0
    %1215 = vmatpush2.msra.mxu0 0.0
    %1216 = vmatprep.subr.mxu0 0.0
    %1217 = vmatpush2.msra.mxu0 0.0
    %1218 = vmatprep.subr.mxu0 0.0
    %1219 = vmatpush2.msra.mxu0 0.0
    %1220 = vmatprep.subr.mxu0 0.0
    %1221 = vmatpush2.msra.mxu0 0.0
    %1222 = vmatprep.subr.mxu0 0.0
    %1223 = vmatpush2.msra.mxu0 0.0
    %1224 = vmatprep.subr.mxu0 0.0
    %1225 = vmatpush2.msra.mxu0 0.0
    %1226 = vmatprep.subr.mxu0 0.0
    %1227 = vmatpush2.msra.mxu0 0.0
    %1228 = vmatprep.mubr.f32.mxu0 0.0
    %1229 = vmatmul.mubr.f32.gmra.mxu0 %v1162
    %v1230 = vpop.f32.mrf.mxu0
    %v1231 = vadd.f32 0.0, %v1230
    %v1232 = vpop.f32.mrf.mxu0
    %1233 = vdwg.mxu0
    %v1235 = vrot.slane %v1231, 1
    %v1236 = vrot.slane %v1231, 2
    %v1239 = vadd.f32 %v147, %v1235
    %v1240 = vadd.f32 %v152, %v1236
    %v1241 = vxor.u32 %v1239, 2147483648
    %v1242 = vxor.u32 %v1240, 2147483648
    %v1243 = vmul.f32 %v1241, 1.442695
    %v1244 = vpow.pop %v1243
    %v1245 = vmul.f32 %v1242, 1.442695
    %v1246 = vpow.pop %v1245
    %v1247 = vadd.f32 %v1244, 1.0
    %v1248 = vadd.f32 %v1246, 1.0
    %v1249 = vrcp.pop %v1247
    %v1250 = vmul.f32 1.0, %v1249
    %v1251 = vrcp.pop %v1248
    %v1252 = vmul.f32 1.0, %v1251
    %v1253 = vadd.f32 %v1231, %v259
    %v1255 = vrot.slane %v1253, 1
    %v1256 = vrot.slane %v1253, 2
    %1257 = vrot.lane.b32.xlu0 %v1255, 64
    %v1258 = vpop.permute.xlu0 %1257
    %1259 = vrot.lane.b32.xlu0 %v1256, 64
    %v1260 = vpop.permute.xlu0 %1259
    %v1263 = vmul.f32 %v1250, %v1258
    %v1264 = vmul.f32 %v1252, %v1260
    %1267 = vrot.lane.b32.xlu0 %v1263, 64
    %v1268 = vpop.permute.xlu0 %1267
    %1269 = vrot.lane.b32.xlu0 %v1264, 64
    %v1270 = vpop.permute.xlu0 %1269
    %v1273 = vadd.f32 %v147, %v1268
    %v1274 = vadd.f32 %v152, %v1270
    %v1275 = vtanh.pop %v1273
    %v1276 = vtanh.pop %v1274
    %v1277 = vsub.f32 1.0, %v1250
    %v1278 = vsub.f32 1.0, %v1252
    %1281 = vrot.lane.b32.xlu0 %v1275, 96
    %v1282 = vpop.permute.xlu0 %1281
    %1283 = vrot.lane.b32.xlu0 %v1276, 96
    %v1284 = vpop.permute.xlu0 %1283
    %v1287 = vmul.f32 %v1277, %v1282
    %v1288 = vmul.f32 %v1278, %v1284
    %v1289 = vrot.slane %v1153, 7
    %v1290 = vrot.slane %v1154, 7
    %v1293 = vmul.f32 %v1250, %v1289
    %v1294 = vmul.f32 %v1252, %v1290
    %v1295 = vadd.f32 %v1287, %v1293
    %v1296 = vadd.f32 %v1288, %v1294
    %v1297 = vld [vmem:[%s6] sm:$0xff]
    %v1298 = vld [vmem:[%s6 + $0x8] sm:$0xff]
    %v1299 = vld [vmem:[%s6 + $0x10] sm:$0xff]
    %v1300 = vld [vmem:[%s6 + $0x18] sm:$0xff]
    %s1301 = sld [smem:[#allocation2]]
    %v1302 = vstv %s1301
    %v1305 = vrot.slane %v1295, 7
    %v1306 = vrot.slane %v1296, 6
    %v1307 = vsel %vm310, %v1306, %v1305
    %1308 = vrot.lane.b32.xlu0 %v1307, 96
    %v1309 = vpop.permute.xlu0 %1308
    %v1310 = vsel %vm166, %v1309, 0
    %1312 = vmatprep.subr.mxu0 0.0
    %1313 = vmatpush1.msra.mxu0 0.0
    %1314 = vmatprep.subr.mxu0 0.0
    %1315 = vmatpush1.msra.mxu0 0.0
    %1316 = vmatprep.subr.mxu0 0.0
    %1317 = vmatpush1.msra.mxu0 0.0
    %1318 = vmatprep.subr.mxu0 0.0
    %1319 = vmatpush1.msra.mxu0 0.0
    %1320 = vmatprep.subr.mxu0 0.0
    %1321 = vmatpush1.msra.mxu0 0.0
    %1322 = vmatprep.subr.mxu0 0.0
    %1323 = vmatpush1.msra.mxu0 0.0
    %1324 = vmatprep.subr.mxu0 0.0
    %1325 = vmatpush1.msra.mxu0 0.0
    %1326 = vmatprep.subr.mxu0 0.0
    %1327 = vmatpush1.msra.mxu0 0.0
    %1328 = vmatprep.subr.mxu0 0.0
    %1329 = vmatpush1.msra.mxu0 0.0
    %1330 = vmatprep.subr.mxu0 0.0
    %1331 = vmatpush1.msra.mxu0 0.0
    %1332 = vmatprep.subr.mxu0 0.0
    %1333 = vmatpush1.msra.mxu0 0.0
    %1334 = vmatprep.subr.mxu0 0.0
    %1335 = vmatpush1.msra.mxu0 0.0
    %1336 = vmatprep.subr.mxu0 0.0
    %1337 = vmatpush1.msra.mxu0 %v1300
    %1338 = vmatprep.subr.mxu0 0.0
    %1339 = vmatpush1.msra.mxu0 %v1299
    %1340 = vmatprep.subr.mxu0 0.0
    %1341 = vmatpush1.msra.mxu0 %v1298
    %1342 = vmatprep.subr.mxu0 0.0
    %1343 = vmatpush1.msra.mxu0 %v1297
    %1344 = vmatprep.subr.mxu0 0.0
    %1345 = vmatpush2.msra.mxu0 0.0
    %1346 = vmatprep.subr.mxu0 0.0
    %1347 = vmatpush2.msra.mxu0 0.0
    %1348 = vmatprep.subr.mxu0 0.0
    %1349 = vmatpush2.msra.mxu0 0.0
    %1350 = vmatprep.subr.mxu0 0.0
    %1351 = vmatpush2.msra.mxu0 0.0
    %1352 = vmatprep.subr.mxu0 0.0
    %1353 = vmatpush2.msra.mxu0 0.0
    %1354 = vmatprep.subr.mxu0 0.0
    %1355 = vmatpush2.msra.mxu0 0.0
    %1356 = vmatprep.subr.mxu0 0.0
    %1357 = vmatpush2.msra.mxu0 0.0
    %1358 = vmatprep.subr.mxu0 0.0
    %1359 = vmatpush2.msra.mxu0 0.0
    %1360 = vmatprep.subr.mxu0 0.0
    %1361 = vmatpush2.msra.mxu0 0.0
    %1362 = vmatprep.subr.mxu0 0.0
    %1363 = vmatpush2.msra.mxu0 0.0
    %1364 = vmatprep.subr.mxu0 0.0
    %1365 = vmatpush2.msra.mxu0 0.0
    %1366 = vmatprep.subr.mxu0 0.0
    %1367 = vmatpush2.msra.mxu0 0.0
    %1368 = vmatprep.subr.mxu0 0.0
    %1369 = vmatpush2.msra.mxu0 0.0
    %1370 = vmatprep.subr.mxu0 0.0
    %1371 = vmatpush2.msra.mxu0 0.0
    %1372 = vmatprep.subr.mxu0 0.0
    %1373 = vmatpush2.msra.mxu0 0.0
    %1374 = vmatprep.subr.mxu0 0.0
    %1375 = vmatpush2.msra.mxu0 0.0
    %1376 = vmatprep.mubr.f32.mxu0 0.0
    %1377 = vmatmul.mubr.f32.gmra.mxu0 %v1310
    %v1378 = vpop.f32.mrf.mxu0
    %v1379 = vadd.f32 %v1302, %v1378
    %v1380 = vpop.f32.mrf.mxu0
    %1381 = vdwg.mxu0
    %vm1382 = vcmask 1024
    %1383 = vst.msk [vmem:[%s8] sm:$0x3] %vm1382, %v1379
    // Predicated region
    $region42: #{tpu_custom_call.1} parent=1 // pred_check
      _
    $region43: #{tpu_custom_call.1} parent=1 // pred_check_branch
      %1385 = sbr.rel (0) target = $region45
    $region44: #{tpu_custom_call.1} parent=1 // pred_region
      _
    $region45: #{tpu_custom_call.1} parent=1 // pred_fallthru
      _
    // Predicated region
    $region46: #{tpu_custom_call.1} parent=1 // pred_check
      _
    $region47: #{tpu_custom_call.1} parent=1 // pred_check_branch
      %1387 = sbr.rel (0) target = $region49
    $region48: #{tpu_custom_call.1} parent=1 // pred_region
      _
    $region49: #{tpu_custom_call.1} parent=1 // pred_fallthru
      _
    %1388 = vsyncpa [#allocation4], 1
    %1389 = vsyncpa [#allocation6], 1

</llo_original>
